<compile_context>
chip_gen: v7x
topology: tpu7x:2x2x1
jax: 0.10.0
libtpu: 0.0.40
codegen_flags: <defaults>
</compile_context>

<pallas_src>
import functools
import math

import jax
import jax.numpy as jnp
from jax.experimental import pallas as pl
from jax.experimental.pallas import tpu as pltpu


# ----------------------------------------------------------------------------
# helpers
# ----------------------------------------------------------------------------
def _round_up(x, m):
    return ((x + m - 1) // m) * m


def _default_row_tile():
    # v5e MXU is 4x128x128 -> TM=128; v6e/v7x MXU is 2x256x256 -> TM=256.
    try:
        dk = jax.devices()[0].device_kind.lower()
        if "v5" in dk:
            return 128
    except Exception:
        pass
    return 256


def _vmem_limit_bytes():
    # Generation-aware scoped-VMEM limit (~85% of physical capacity).
    cap = None
    try:
        cap = getattr(pltpu.get_tpu_info(), "vmem_capacity_bytes", None)
    except Exception:
        cap = None
    if not cap:
        cap = 64 * 1024 * 1024          # conservative fallback (v7x physical)
    return int(cap * 85 // 100)


# ----------------------------------------------------------------------------
# Kernel 1: per-metapath GCN + per-row-tile semantic-attention partial logit.
#   grid = (P, n_row_tiles, n_k_tiles)   ("parallel", "parallel", "arbitrary")
# ----------------------------------------------------------------------------
def gcn_att_kernel(prelu_ref, adj_ref, sf_ref, bg_ref, wa_ref, ba_ref,
                   attv_ref, emb_ref, logit_ref, acc_ref, *, n_true):
    i = pl.program_id(0)               # metapath index
    r = pl.program_id(1)               # row-tile index
    k = pl.program_id(2)               # contraction (column) tile index
    nk = pl.num_programs(2)
    tm = acc_ref.shape[0]

    @pl.when(k == 0)
    def _():
        acc_ref[...] = jnp.zeros_like(acc_ref)

    # acc += adj_i[row_tile, k_tile] @ seq_fts_i[k_tile]   (f32 accumulation)
    adj = adj_ref[0]                                        # (tm, tk)
    if adj.dtype != sf_ref.dtype:
        adj = adj.astype(sf_ref.dtype)                      # bw-narrow adj path
    acc_ref[...] += jnp.dot(adj, sf_ref[0],
                            preferred_element_type=jnp.float32)

    @pl.when(k == nk - 1)
    def _():
        # bias + PReLU
        out = acc_ref[...] + bg_ref[0]                      # (tm, Dp) + (1, Dp)
        a = prelu_ref[0, i]                                 # PReLU slope (SMEM)
        emb = jnp.where(out > 0.0, out, out * a)
        emb_ref[0, 0] = emb.astype(emb_ref.dtype)

        # per-row-tile semantic-attention partial:
        #   sum over valid rows of  att_vec . tanh(e @ Wa + ba)
        proj = jnp.dot(emb.astype(wa_ref.dtype), wa_ref[...],
                       preferred_element_type=jnp.float32) + ba_ref[...]
        sp = jnp.tanh(proj)                                 # (tm, Dp)
        row_ids = jax.lax.broadcasted_iota(jnp.int32, (tm, 1), 0) + r * tm
        valid = (row_ids < n_true).astype(jnp.float32)      # mask padded rows
        partial = jnp.sum(attv_ref[...] * sp * valid)       # scalar
        logit_ref[...] = jnp.broadcast_to(
            partial, logit_ref.shape).astype(logit_ref.dtype)


# ----------------------------------------------------------------------------
# Kernel 2: row-tiled weighted sum of the P embeddings with precomputed beta.
#   grid = (n_row_tiles,)   embeds laid out (row_tiles, P, tm, d_pad) so each
#   step reads one contiguous slab.
# ----------------------------------------------------------------------------
def combine_kernel(beta_ref, emb_ref, out_ref):
    # beta_ref: SMEM (1, P); emb_ref: (1, P, TM, Dp); out_ref: (TM, Dp)
    acc = jnp.zeros(out_ref.shape, jnp.float32)
    for p in range(emb_ref.shape[1]):                       # P is static/small
        acc = acc + beta_ref[0, p] * emb_ref[0, p].astype(jnp.float32)
    out_ref[...] = acc.astype(out_ref.dtype)


# ----------------------------------------------------------------------------
# Wrapper
# ----------------------------------------------------------------------------
def mp_encoder_forward(h, mps, params, *, compute_dtype=jnp.float32,
                       adj_dtype=None, out_dtype=None,
                       row_tile=None, k_tile=None):
    """h: (N, D) float32; mps: (P, N, N) float32 dense adjacency."""
    P, N, _ = mps.shape
    D = h.shape[1]
    if P == 0:
        return h

    cdt = jnp.dtype(compute_dtype)
    adj_dt = jnp.dtype(adj_dtype) if adj_dtype is not None else cdt
    out_dt = jnp.dtype(out_dtype) if out_dtype is not None else jnp.dtype(h.dtype)

    # ---- tile geometry (VMEM footprint independent of N) --------------------
    # sublane multiple depends on the narrowest streamed dtype: 8/16/32.
    sub = max(8, 32 // min(cdt.itemsize, adj_dt.itemsize))
    tm = row_tile if row_tile is not None else _default_row_tile()
    tm = _round_up(min(tm, _round_up(N, sub)), sub)
    tk_desired = k_tile if k_tile is not None else 512       # long K DMA chunks
    n_pad0 = _round_up(N, tm)
    if n_pad0 <= tk_desired:
        tk = n_pad0                                          # single K tile
        n_pad = n_pad0
    else:
        tk = _round_up(min(tk_desired, n_pad0), 128)         # lane-dense K tile
        n_pad = _round_up(N, math.lcm(tm, tk))
    d_pad = _round_up(D, 128)
    n_row_tiles = n_pad // tm
    n_k_tiles = n_pad // tk

    # ---- hoisted per-metapath feature transform: seq_fts = h @ Wg_i ---------
    h_p = jnp.pad(h.astype(jnp.float32), ((0, n_pad - N), (0, d_pad - D)))
    wg_p = jnp.pad(params["gcn_w"].astype(jnp.float32),
                   ((0, 0), (0, d_pad - D), (0, d_pad - D)))
    if cdt == jnp.float32:
        sf = jnp.einsum("nd,pdk->pnk", h_p, wg_p,
                        precision=jax.lax.Precision.HIGHEST)
    else:
        sf = jnp.einsum("nd,pdk->pnk", h_p.astype(cdt), wg_p.astype(cdt),
                        preferred_element_type=jnp.float32)
    sf = sf.astype(cdt)                                      # (P, n_pad, d_pad)

    # ---- pad / cast remaining operands --------------------------------------
    # TODO(synk): adjacency entries (1/deg) could be quantized further
    # (int8 per-row scale on v5e/v6e, fp8 on v7x); only bf16 narrowing is
    # supported here via adj_dtype.
    adj_p = jnp.pad(mps, ((0, 0), (0, n_pad - N),
                          (0, n_pad - N))).astype(adj_dt)
    bg_p = jnp.pad(params["gcn_b"],
                   ((0, 0), (0, 0), (0, d_pad - D))).astype(jnp.float32)
    wa_p = jnp.pad(params["att_fc_w"],
                   ((0, d_pad - D), (0, d_pad - D))).astype(cdt)
    ba_p = jnp.pad(params["att_fc_b"],
                   ((0, 0), (0, d_pad - D))).astype(jnp.float32)
    attv_p = jnp.pad(params["att_vec"],
                     ((0, 0), (0, d_pad - D))).astype(jnp.float32)
    prelu = params["prelu_a"].reshape(1, P).astype(jnp.float32)

    vmem_limit = _vmem_limit_bytes()
    bpe_a = adj_dt.itemsize
    bpe_c = cdt.itemsize

    cost1 = pl.CostEstimate(
        flops=int(2 * P * n_pad * n_pad * d_pad
                  + 2 * P * n_pad * d_pad * d_pad),
        transcendentals=int(P * n_pad * d_pad),
        bytes_accessed=int(P * n_pad * n_pad * bpe_a
                           + P * n_row_tiles * n_pad * d_pad * bpe_c
                           + P * n_pad * d_pad * bpe_c
                           + d_pad * d_pad * bpe_c),
    )

    kernel1 = functools.partial(gcn_att_kernel, n_true=N)
    embeds, logits_part = pl.pallas_call(
        kernel1,
        out_shape=(
            # grouped by row tile so kernel 2 reads one contiguous slab
            jax.ShapeDtypeStruct((n_row_tiles, P, tm, d_pad), cdt),
            # per-(metapath, row-tile) partial logits; lane-dense (8,128) block
            jax.ShapeDtypeStruct((P, n_row_tiles, 8, 128), jnp.float32),
        ),
        grid_spec=pltpu.PrefetchScalarGridSpec(
            num_scalar_prefetch=0,
            grid=(P, n_row_tiles, n_k_tiles),
            in_specs=[
                pl.BlockSpec(memory_space=pltpu.MemorySpace.SMEM),        # PReLU
                pl.BlockSpec((1, tm, tk), lambda i, r, k: (i, r, k)),     # adj
                pl.BlockSpec((1, tk, d_pad), lambda i, r, k: (i, k, 0)),  # seq_fts
                pl.BlockSpec((1, 1, d_pad), lambda i, r, k: (i, 0, 0)),   # bias
                pl.BlockSpec((d_pad, d_pad), lambda i, r, k: (0, 0)),     # Wa
                pl.BlockSpec((1, d_pad), lambda i, r, k: (0, 0)),         # ba
                pl.BlockSpec((1, d_pad), lambda i, r, k: (0, 0)),         # att_vec
            ],
            out_specs=[
                pl.BlockSpec((1, 1, tm, d_pad), lambda i, r, k: (r, i, 0, 0)),
                pl.BlockSpec((1, 1, 8, 128), lambda i, r, k: (i, r, 0, 0)),
            ],
            scratch_shapes=[pltpu.VMEM((tm, d_pad), jnp.float32)],        # acc
        ),
        compiler_params=pltpu.CompilerParams(
            dimension_semantics=("parallel", "parallel", "arbitrary"),
            vmem_limit_bytes=vmem_limit,
        ),
        cost_estimate=cost1,
    )(prelu, adj_p, sf, bg_p, wa_p, ba_p, attv_p)

    # reduce per-row-tile partials -> (P,) logits; tiny softmax over P scalars
    logits = jnp.sum(logits_part[:, :, 0, 0], axis=1) / float(N)
    beta = jax.nn.softmax(logits).reshape(1, P).astype(jnp.float32)

    cost2 = pl.CostEstimate(
        flops=int(2 * P * n_pad * d_pad),
        transcendentals=0,
        bytes_accessed=int(P * n_pad * d_pad * bpe_c
                           + n_pad * d_pad * out_dt.itemsize),
    )

    z_pad = pl.pallas_call(
        combine_kernel,
        out_shape=jax.ShapeDtypeStruct((n_pad, d_pad), out_dt),
        grid_spec=pltpu.PrefetchScalarGridSpec(
            num_scalar_prefetch=0,
            grid=(n_row_tiles,),
            in_specs=[
                pl.BlockSpec(memory_space=pltpu.MemorySpace.SMEM),        # beta
                pl.BlockSpec((1, P, tm, d_pad), lambda r: (r, 0, 0, 0)),  # embeds
            ],
            out_specs=pl.BlockSpec((tm, d_pad), lambda r: (r, 0)),
        ),
        compiler_params=pltpu.CompilerParams(
            dimension_semantics=("parallel",),
            vmem_limit_bytes=vmem_limit,
        ),
        cost_estimate=cost2,
    )(beta, embeds)

    return z_pad[:N, :D]


# ----------------------------------------------------------------------------
# Deterministic parameter init (mirrors the PyTorch module's __init__)
# ----------------------------------------------------------------------------
def init_params(key, P, D):
    k = jax.random.split(key, P + 2)
    gain = 1.414
    # xavier_normal_ std = gain * sqrt(2 / (fan_in + fan_out)); fan_in=fan_out=D
    std = gain * (2.0 / (D + D)) ** 0.5
    gcn_w = jnp.stack(
        [std * jax.random.normal(k[i], (D, D), jnp.float32) for i in range(P)],
        axis=0)                                      # stored pre-transposed
    gcn_b = jnp.zeros((P, 1, D), jnp.float32)        # GCN bias, filled 0
    prelu_a = jnp.full((P, 1, 1), 0.25, jnp.float32) # nn.PReLU default
    att_fc_w = std * jax.random.normal(k[P], (D, D), jnp.float32)  # transposed
    att_fc_b = jnp.zeros((1, D), jnp.float32)
    std_att = gain * (2.0 / (D + 1)) ** 0.5          # (1, D) attention vector
    att_vec = std_att * jax.random.normal(k[P + 1], (1, D), jnp.float32)
    return dict(gcn_w=gcn_w, gcn_b=gcn_b, prelu_a=prelu_a,
                att_fc_w=att_fc_w, att_fc_b=att_fc_b, att_vec=att_vec)


# pure-JAX reference for a sanity check
def reference_forward(h, mps, params):
    P = mps.shape[0]
    embeds = []
    for i in range(P):
        out = mps[i] @ (h @ params["gcn_w"][i]) + params["gcn_b"][i]
        a = params["prelu_a"][i]
        embeds.append(jnp.where(out > 0, out, a * out))
    logits = []
    for i in range(P):
        sp = jnp.tanh(embeds[i] @ params["att_fc_w"]
                      + params["att_fc_b"]).mean(axis=0)
        logits.append(jnp.sum(params["att_vec"][0] * sp))
    beta = jax.nn.softmax(jnp.stack(logits))
    z = sum(beta[i] * embeds[i] for i in range(P))
    return z


if __name__ == "__main__":
    P, N, D = 3, 300, 32
    key = jax.random.PRNGKey(0)
    kh, kadj, kp = jax.random.split(key, 3)

    h = jax.random.normal(kh, (N, D), jnp.float32)
    # dense row-normalized "adjacency" matrices standing in for the sparse mps
    # TODO(synk): torch.spmm sparse adjacency is materialized densely here; a
    # CSR-gather kernel is out of scope.
    raw = jax.random.uniform(kadj, (P, N, N), jnp.float32)
    adj = (raw > 0.9).astype(jnp.float32) + jnp.eye(N)[None]
    mps = adj / jnp.sum(adj, axis=-1, keepdims=True)

    params = init_params(kp, P, D)
    with jax.default_matmul_precision("highest"):
        z_ref = reference_forward(h, mps, params)

    # f32 path with explicit small tiles: exercises multiple row tiles AND the
    # K-tiled adjacency contraction; parity with the PyTorch-equivalent ref.
    z_f32 = jax.block_until_ready(
        mp_encoder_forward(h, mps, params, compute_dtype=jnp.float32,
                           row_tile=128, k_tile=128))
    assert z_f32.shape == (N, D)
    assert jnp.allclose(z_f32, z_ref, atol=1e-4, rtol=1e-4), "f32 mismatch"

    # bf16 MXU path (f32 accumulation), device-default tiles.
    z_bf16 = jax.block_until_ready(
        mp_encoder_forward(h, mps, params, compute_dtype=jnp.bfloat16))
    assert z_bf16.shape == (N, D)
    assert jnp.allclose(z_bf16, z_ref, atol=5e-2, rtol=5e-2), "bf16 mismatch"

    # f32 compute with bf16 adjacency stream (halves the dominant HBM traffic).
    z_mix = jax.block_until_ready(
        mp_encoder_forward(h, mps, params, compute_dtype=jnp.float32,
                           adj_dtype=jnp.bfloat16))
    assert z_mix.shape == (N, D)
    assert jnp.allclose(z_mix, z_ref, atol=5e-2, rtol=5e-2), "bf16-adj mismatch"

    # TODO(synk): attn_drop (nn.Dropout on the attention vector) is treated as
    # eval-mode identity; training-time dropout is not implemented.
    print("KERNEL_OK")
</pallas_src>

<mosaic_0001>
module attributes {stable_mosaic.version = 11 : i64} {
  func.func @gcn_att_kernel(%arg0: i32, %arg1: i32, %arg2: i32, %arg3: memref<1x3xf32, #tpu.memory_space<smem>>, %arg4: memref<1x128x128xf32, #tpu.memory_space<vmem>>, %arg5: memref<1x128x128xf32, #tpu.memory_space<vmem>>, %arg6: memref<1x1x128xf32, #tpu.memory_space<vmem>>, %arg7: memref<128x128xf32, #tpu.memory_space<vmem>>, %arg8: memref<1x128xf32, #tpu.memory_space<vmem>>, %arg9: memref<1x128xf32, #tpu.memory_space<vmem>>, %arg10: memref<1x1x128x128xf32, #tpu.memory_space<vmem>>, %arg11: memref<1x1x8x128xf32, #tpu.memory_space<vmem>>, %arg12: memref<128x128xf32, #tpu.memory_space<vmem>>) attributes {dimension_semantics = [#tpu.dimension_semantics<parallel>, #tpu.dimension_semantics<parallel>, #tpu.dimension_semantics<arbitrary>], iteration_bounds = array<i64: 3, 3, 3>, scalar_prefetch = 0 : i64, scratch_operands = 1 : i64, tpu.core_type = #tpu.core_type<tc>, window_params = [{transform_indices = @transform_0, window_bounds = array<i64: 1, 3>}, {transform_indices = @transform_1, window_bounds = array<i64: 1, 128, 128>}, {transform_indices = @transform_2, window_bounds = array<i64: 1, 128, 128>}, {transform_indices = @transform_3, window_bounds = array<i64: 1, 1, 128>}, {pipeline_mode = #tpu.pipeline_mode<synchronous>, transform_indices = @transform_4, window_bounds = array<i64: 128, 128>}, {pipeline_mode = #tpu.pipeline_mode<synchronous>, transform_indices = @transform_5, window_bounds = array<i64: 1, 128>}, {pipeline_mode = #tpu.pipeline_mode<synchronous>, transform_indices = @transform_6, window_bounds = array<i64: 1, 128>}, {transform_indices = @transform_7, window_bounds = array<i64: 1, 1, 128, 128>}, {transform_indices = @transform_8, window_bounds = array<i64: 1, 1, 8, 128>}]} {
    %c0_i32 = arith.constant 0 : i32
    %0 = arith.cmpi eq, %arg2, %c0_i32 : i32
    %1 = arith.extui %0 : i1 to i32
    %c0_i32_0 = arith.constant 0 : i32
    %2 = arith.cmpi ne, %1, %c0_i32_0 : i32
    scf.if %2 {
      %cst_11 = arith.constant 0.000000e+00 : f32
      %14 = vector.broadcast %cst_11 : f32 to vector<128x128xf32>
      %c0_12 = arith.constant 0 : index
      %c0_13 = arith.constant 0 : index
      %15 = vector.load %arg12[%c0_12, %c0_13] : memref<128x128xf32, #tpu.memory_space<vmem>>, vector<128x128xf32>
      tpu.vector_store %arg12[%c0_12, %c0_13], %14 {strides = array<i32>} : memref<128x128xf32, #tpu.memory_space<vmem>>, vector<128x128xf32>,
    } else {
    }
    %c0 = arith.constant 0 : index
    %c0_1 = arith.constant 0 : index
    %c0_2 = arith.constant 0 : index
    %3 = vector.load %arg4[%c0, %c0_1, %c0_2] : memref<1x128x128xf32, #tpu.memory_space<vmem>>, vector<1x128x128xf32>
    %4 = vector.shape_cast %3 : vector<1x128x128xf32> to vector<128x128xf32>
    %c0_3 = arith.constant 0 : index
    %c0_4 = arith.constant 0 : index
    %5 = vector.load %arg12[%c0_3, %c0_4] : memref<128x128xf32, #tpu.memory_space<vmem>>, vector<128x128xf32>
    %c0_5 = arith.constant 0 : index
    %c0_6 = arith.constant 0 : index
    %c0_7 = arith.constant 0 : index
    %6 = vector.load %arg5[%c0_5, %c0_6, %c0_7] : memref<1x128x128xf32, #tpu.memory_space<vmem>>, vector<1x128x128xf32>
    %7 = vector.shape_cast %6 : vector<1x128x128xf32> to vector<128x128xf32>
    %cst = arith.constant dense<0.000000e+00> : vector<128x128xf32>
    %8 = tpu.matmul %4, %7, %cst {dimension_numbers = #tpu.dot_dimension_numbers<[1], [0], [0], [1], [0, 0, 1, 1], [], []>} : vector<128x128xf32>, vector<128x128xf32>, vector<128x128xf32> -> vector<128x128xf32>
    %9 = arith.addf %5, %8 : vector<128x128xf32>
    %c0_8 = arith.constant 0 : index
    %c0_9 = arith.constant 0 : index
    %10 = vector.load %arg12[%c0_8, %c0_9] : memref<128x128xf32, #tpu.memory_space<vmem>>, vector<128x128xf32>
    tpu.vector_store %arg12[%c0_8, %c0_9], %9 {strides = array<i32>} : memref<128x128xf32, #tpu.memory_space<vmem>>, vector<128x128xf32>,
    %c2_i32 = arith.constant 2 : i32
    %11 = arith.cmpi eq, %arg2, %c2_i32 : i32
    %12 = arith.extui %11 : i1 to i32
    %c0_i32_10 = arith.constant 0 : i32
    %13 = arith.cmpi ne, %12, %c0_i32_10 : i32
    scf.if %13 {
      %c0_11 = arith.constant 0 : index
      %c0_12 = arith.constant 0 : index
      %14 = vector.load %arg12[%c0_11, %c0_12] : memref<128x128xf32, #tpu.memory_space<vmem>>, vector<128x128xf32>
      %c0_13 = arith.constant 0 : index
      %c0_14 = arith.constant 0 : index
      %c0_15 = arith.constant 0 : index
      %15 = vector.load %arg6[%c0_13, %c0_14, %c0_15] : memref<1x1x128xf32, #tpu.memory_space<vmem>>, vector<1x1x128xf32>
      %16 = vector.shape_cast %15 : vector<1x1x128xf32> to vector<1x128xf32>
      %17 = vector.broadcast %16 : vector<1x128xf32> to vector<128x128xf32>
      %18 = arith.addf %14, %17 : vector<128x128xf32>
      %c0_16 = arith.constant 0 : index
      %19 = arith.index_cast %arg0 : i32 to index
      %20 = memref.load %arg3[%c0_16, %19] : memref<1x3xf32, #tpu.memory_space<smem>>
      %cst_17 = arith.constant 0.000000e+00 : f32
      %21 = vector.broadcast %cst_17 : f32 to vector<128x128xf32>
      %22 = arith.cmpf ogt, %18, %21 : vector<128x128xf32>
      %23 = vector.broadcast %20 : f32 to vector<128x128xf32>
      %24 = arith.mulf %18, %23 : vector<128x128xf32>
      %25 = arith.select %22, %18, %24 : vector<128x128xi1>, vector<128x128xf32>
      %c0_18 = arith.constant 0 : index
      %c0_19 = arith.constant 0 : index
      %c0_20 = arith.constant 0 : index
      %c0_21 = arith.constant 0 : index
      %26 = vector.load %arg10[%c0_18, %c0_19, %c0_20, %c0_21] : memref<1x1x128x128xf32, #tpu.memory_space<vmem>>, vector<1x1x128x128xf32>
      %27 = vector.shape_cast %26 : vector<1x1x128x128xf32> to vector<128x128xf32>
      %28 = vector.shape_cast %25 : vector<128x128xf32> to vector<1x1x128x128xf32>
      tpu.vector_store %arg10[%c0_18, %c0_19, %c0_20, %c0_21], %28 {strides = array<i32>} : memref<1x1x128x128xf32, #tpu.memory_space<vmem>>, vector<1x1x128x128xf32>,
      %c0_22 = arith.constant 0 : index
      %c0_23 = arith.constant 0 : index
      %29 = vector.load %arg7[%c0_22, %c0_23] : memref<128x128xf32, #tpu.memory_space<vmem>>, vector<128x128xf32>
      %cst_24 = arith.constant dense<0.000000e+00> : vector<128x128xf32>
      %30 = tpu.matmul %25, %29, %cst_24 {dimension_numbers = #tpu.dot_dimension_numbers<[1], [0], [0], [1], [0, 0, 1, 1], [], []>} : vector<128x128xf32>, vector<128x128xf32>, vector<128x128xf32> -> vector<128x128xf32>
      %c0_25 = arith.constant 0 : index
      %c0_26 = arith.constant 0 : index
      %31 = vector.load %arg8[%c0_25, %c0_26] : memref<1x128xf32, #tpu.memory_space<vmem>>, vector<1x128xf32>
      %32 = vector.broadcast %31 : vector<1x128xf32> to vector<128x128xf32>
      %33 = arith.addf %30, %32 : vector<128x128xf32>
      %34 = math.tanh %33 : vector<128x128xf32>
      %35 = tpu.iota {dimensions = array<i32: 0>} : vector<128x1xi32>
      %c128_i32 = arith.constant 128 : i32
      %36 = arith.muli %arg1, %c128_i32 : i32
      %37 = vector.broadcast %36 : i32 to vector<128x1xi32>
      %38 = arith.addi %35, %37 : vector<128x1xi32>
      %c300_i32 = arith.constant 300 : i32
      %39 = vector.broadcast %c300_i32 : i32 to vector<128x1xi32>
      %40 = arith.cmpi slt, %38, %39 : vector<128x1xi32>
      %41 = arith.extui %40 : vector<128x1xi1> to vector<128x1xi32>
      %42 = arith.sitofp %41 : vector<128x1xi32> to vector<128x1xf32>
      %c0_27 = arith.constant 0 : index
      %c0_28 = arith.constant 0 : index
      %43 = vector.load %arg9[%c0_27, %c0_28] : memref<1x128xf32, #tpu.memory_space<vmem>>, vector<1x128xf32>
      %44 = vector.broadcast %43 : vector<1x128xf32> to vector<128x128xf32>
      %45 = arith.mulf %44, %34 : vector<128x128xf32>
      %46 = vector.broadcast %42 : vector<128x1xf32> to vector<128x128xf32>
      %47 = arith.mulf %45, %46 : vector<128x128xf32>
      %48 = vector.shape_cast %47 : vector<128x128xf32> to vector<1x128x128xf32>
      %cst_29 = arith.constant dense<0.000000e+00> : vector<1xf32>
      %49 = vector.multi_reduction <add>, %48, %cst_29 [1, 2] : vector<1x128x128xf32> to vector<1xf32>
      %50 = vector.shape_cast %49 : vector<1xf32> to vector<1x1x1xf32>
      %51 = vector.extract %50[0, 0, 0] : f32 from vector<1x1x1xf32>
      %52 = vector.broadcast %51 : f32 to vector<1x1x8x128xf32>
      %c0_30 = arith.constant 0 : index
      %c0_31 = arith.constant 0 : index
      %c0_32 = arith.constant 0 : index
      %c0_33 = arith.constant 0 : index
      %53 = vector.load %arg11[%c0_30, %c0_31, %c0_32, %c0_33] : memref<1x1x8x128xf32, #tpu.memory_space<vmem>>, vector<1x1x8x128xf32>
      tpu.vector_store %arg11[%c0_30, %c0_31, %c0_32, %c0_33], %52 {strides = array<i32>} : memref<1x1x8x128xf32, #tpu.memory_space<vmem>>, vector<1x1x8x128xf32>,
    } else {
    }
    return
  }
  func.func @transform_0(%arg0: i32, %arg1: i32, %arg2: i32) -> (i32, i32) {
    %c0_i32 = arith.constant 0 : i32
    %c0_i32_0 = arith.constant 0 : i32
    %c0_i32_1 = arith.constant 0 : i32
    return %c0_i32, %c0_i32_0 : i32, i32
  }
  func.func @transform_1(%arg0: i32, %arg1: i32, %arg2: i32) -> (i32, i32, i32) {
    %c0_i32 = arith.constant 0 : i32
    return %arg0, %arg1, %arg2 : i32, i32, i32
  }
  func.func @transform_2(%arg0: i32, %arg1: i32, %arg2: i32) -> (i32, i32, i32) {
    %c0_i32 = arith.constant 0 : i32
    %c0_i32_0 = arith.constant 0 : i32
    return %arg0, %arg2, %c0_i32 : i32, i32, i32
  }
  func.func @transform_3(%arg0: i32, %arg1: i32, %arg2: i32) -> (i32, i32, i32) {
    %c0_i32 = arith.constant 0 : i32
    %c0_i32_0 = arith.constant 0 : i32
    %c0_i32_1 = arith.constant 0 : i32
    return %arg0, %c0_i32, %c0_i32_0 : i32, i32, i32
  }
  func.func @transform_4(%arg0: i32, %arg1: i32, %arg2: i32) -> (i32, i32) {
    %c0_i32 = arith.constant 0 : i32
    %c0_i32_0 = arith.constant 0 : i32
    %c0_i32_1 = arith.constant 0 : i32
    return %c0_i32, %c0_i32_0 : i32, i32
  }
  func.func @transform_5(%arg0: i32, %arg1: i32, %arg2: i32) -> (i32, i32) {
    %c0_i32 = arith.constant 0 : i32
    %c0_i32_0 = arith.constant 0 : i32
    %c0_i32_1 = arith.constant 0 : i32
    return %c0_i32, %c0_i32_0 : i32, i32
  }
  func.func @transform_6(%arg0: i32, %arg1: i32, %arg2: i32) -> (i32, i32) {
    %c0_i32 = arith.constant 0 : i32
    %c0_i32_0 = arith.constant 0 : i32
    %c0_i32_1 = arith.constant 0 : i32
    return %c0_i32, %c0_i32_0 : i32, i32
  }
  func.func @transform_7(%arg0: i32, %arg1: i32, %arg2: i32) -> (i32, i32, i32, i32) {
    %c0_i32 = arith.constant 0 : i32
    %c0_i32_0 = arith.constant 0 : i32
    %c0_i32_1 = arith.constant 0 : i32
    return %arg1, %arg0, %c0_i32, %c0_i32_0 : i32, i32, i32, i32
  }
  func.func @transform_8(%arg0: i32, %arg1: i32, %arg2: i32) -> (i32, i32, i32, i32) {
    %c0_i32 = arith.constant 0 : i32
    %c0_i32_0 = arith.constant 0 : i32
    %c0_i32_1 = arith.constant 0 : i32
    return %arg0, %arg1, %c0_i32, %c0_i32_0 : i32, i32, i32, i32
  }
}

</mosaic_0001>

<llo_original>
// kernel: tpu_custom_call.1
$region0: #{tpu_custom_call.1}
  #allocation0 [shape = 'u32[]', space=smem, size = 0x4, offset = 0x4, fixed_abs, tag = 'smem constant byte address 0x4 - core index']
  #allocation1 [shape = 'u32[144,128]{1,0:T(1,128)}', space=vmem, size = 0x12000, scoped, tag = 'internal scratch']
  #allocation2 [shape = 'f32[128,128]{1,0:T(8,128)}', space=vmem, size = 0x10000, scoped, tag = 'scratch operand']
  %s0 = inlined_call_operand.hbm [shape: f32[1,3], index: 0, kind: input, shape index: {}]
  %s1 = inlined_call_operand.hbm [shape: f32[3,384,384], index: 1, kind: input, shape index: {}]
  %s2 = inlined_call_operand.hbm [shape: f32[3,384,128], index: 2, kind: input, shape index: {}]
  %s3 = inlined_call_operand.hbm [shape: f32[3,1,128], index: 3, kind: input, shape index: {}]
  %s4 = inlined_call_operand.hbm [shape: f32[128,128], index: 4, kind: input, shape index: {}]
  %s5 = inlined_call_operand.hbm [shape: f32[1,128], index: 5, kind: input, shape index: {}]
  %s6 = inlined_call_operand.hbm [shape: f32[1,128], index: 6, kind: input, shape index: {}]
  %s7 = inlined_call_operand.hbm [shape: f32[3,3,128,128], index: 7, kind: output, shape index: {0}]
  %s8 = inlined_call_operand.hbm [shape: f32[3,3,8,128], index: 8, kind: output, shape index: {1}]
  %9 = xla_tuple %s7, %s8
  %s10 = sld [smem:[#allocation0]]
  $region105: #{tpu_custom_call.1} parent=0
    _
  %s12 = ssub.s32 1, %s10
  %s13 = scalar_select 0, %s12, %s10
  $region1: #{tpu_custom_call.1} parent=0
    #allocation3 [shape = 'u8[512]{0}', space=smem, size = 0x200, scoped, tag = 'input window, operand 0, single buffered']
    #allocation4 [shape = 's32[2]{0}', space=sflag, size = 0x8, scoped, tag = 'scoped memory for tpu_custom_call.1']
    #allocation5 [shape = 's32[2]{0}', space=sflag, size = 0x8, scoped, tag = 'scoped memory for tpu_custom_call.1']
    #allocation6 [shape = 's32[2]{0}', space=sflag, size = 0x8, scoped, tag = 'scoped memory for tpu_custom_call.1']
    #allocation7 [shape = 'u8[131072]{0}', space=vmem, size = 0x20000, scoped, tag = 'input window, operand 1']
    #allocation8 [shape = 'u8[131072]{0}', space=vmem, size = 0x20000, scoped, tag = 'input window, operand 2']
    #allocation9 [shape = 's32[2]{0}', space=sflag, size = 0x8, scoped, tag = 'scoped memory for tpu_custom_call.1']
    #allocation10 [shape = 'u8[1024]{0}', space=vmem, size = 0x400, scoped, tag = 'input window, operand 3']
    #allocation11 [shape = 'u8[65536]{0}', space=vmem, size = 0x10000, scoped, tag = 'input window, operand 4, single buffered']
    #allocation12 [shape = 's32[1]{0}', space=sflag, size = 0x4, scoped, tag = 'scoped memory for tpu_custom_call.1']
    #allocation13 [shape = 'u8[512]{0}', space=vmem, size = 0x400, scoped, tag = 'input window, operand 5, single buffered']
    #allocation14 [shape = 'u8[512]{0}', space=vmem, size = 0x400, scoped, tag = 'input window, operand 6, single buffered']
    #allocation15 [shape = 's32[1]{0}', space=sflag, size = 0x4, scoped, tag = 'scoped memory for tpu_custom_call.1']
    #allocation16 [shape = 'u8[131072]{0}', space=vmem, size = 0x20000, scoped, tag = 'output window, operand 0']
    #allocation17 [shape = 'u8[8192]{0}', space=vmem, size = 0x2000, scoped, tag = 'output window, operand 1']
    #allocation18 [shape = 's32[2]{0}', space=sflag, size = 0x8, scoped, tag = 'scoped memory for tpu_custom_call.1']
    %14 = vsyncpa [#allocation6], 0
    %15 = vsyncpa [#allocation4], 0
    %s16 = scalar_lea.sflag [#allocation4], 1
    %17 = vsyncpa %s16, 0
    %18 = vsyncpa [#allocation9], 0
    %s19 = scalar_lea.sflag [#allocation9], 1
    %20 = vsyncpa %s19, 0
    %21 = vsyncpa [#allocation12], 0
    %22 = vsyncpa [#allocation15], 0
    %23 = vsyncpa [#allocation5], 0
    %s24 = scalar_lea.sflag [#allocation5], 1
    %25 = vsyncpa %s24, 0
    %26 = vsyncpa [#allocation18], 0
    %s27 = scalar_lea.sflag [#allocation18], 1
    %28 = vsyncpa %s27, 0
    loop: start=0, step=1, limit=29
    $region2: #{tpu_custom_call.1} parent=1 // loop_pre_header
      _
    $region3: #{tpu_custom_call.1} parent=1 // loop_header
      %s30 = sphi 0, %s34
      %p31 = scmp.ge.s32.totalorder %s30, 29
      %s37 = sphi 0, %s56
      %s38 = sphi 0, %s52
      %s39 = sphi 0, %s48
      %s40 = sphi 0, %s37
      %s41 = sphi 0, %s38
      %s42 = sphi 0, %s39
      %s43 = sphi 0, %s40
      %s44 = sphi 0, %s41
      %s45 = sphi 0, %s42
      %s57 = sphi 0, %s57
      %s59 = sphi 0, %s57
      %s60 = sphi 0, %s59
      %s74 = sphi 0, %s60
      %s84 = sphi 0, %s86
      %s87 = sphi 0, %s84
      %s88 = sphi 0, %s87
      %s104 = sphi 0, %s88
      %s112 = sphi 0, %s114
      %s115 = sphi 0, %s112
      %s116 = sphi 0, %s115
      %s132 = sphi 0, %s116
      %s138 = sphi 0, %s140
      %s141 = sphi 0, %s138
      %s142 = sphi 0, %s141
      %s158 = sphi 0, %s142
      %s162 = sphi 0, %s162
      %s164 = sphi 0, %s162
      %s165 = sphi 0, %s164
      %s179 = sphi 0, %s165
      %s183 = sphi 0, %s183
      %s185 = sphi 0, %s183
      %s186 = sphi 0, %s185
      %s200 = sphi 0, %s186
      %s204 = sphi 0, %s204
      %s206 = sphi 0, %s204
      %s207 = sphi 0, %s206
      %s221 = sphi 0, %s207
      %s229 = sphi 0, %s231
      %s232 = sphi 0, %s229
      %s233 = sphi 0, %s232
      %s249 = sphi 0, %s233
      %s257 = sphi 0, %s259
      %s260 = sphi 0, %s257
      %s261 = sphi 0, %s260
      %s277 = sphi 0, %s261
    $region4: #{tpu_custom_call.1} parent=1 // loop_header_branch
      %33 = sbr.rel (%p31) target = $region8
    $region5: #{tpu_custom_call.1} parent=1 // loop_body
      %s35 = ssub.s32 %s30, 1
      %s36 = ssub.s32 %s30, 2
      %s46 = sadd.s32 1, %s39
      %p47 = scmp.ge.s32.totalorder %s46, 3
      %s48 = scalar_select %p47, 0, %s46
      %s49 = sadd.s32 1, %s38
      %s50 = scalar_select %p47, %s49, %s38
      %p51 = scmp.ge.s32.totalorder %s50, 3
      %s52 = scalar_select %p51, 0, %s50
      %s53 = sadd.s32 1, %s37
      %s54 = scalar_select %p51, %s53, %s37
      %p55 = scmp.ge.s32.totalorder %s54, 3
      %s56 = scalar_select %p55, 0, %s54
      %s58 = sadd.s32 %s57, 1
      %p61 = scmp.eq.s32.totalorder %s30, 26
      %p62 = scmp.ne.s32.totalorder %s57, %s59
      %p63 = scmp.eq.s32.totalorder %s30, 0
      %p64 = por %p62, %p63
      %p65 = scmp.ne.s32.totalorder %s57, %s59
      %p66 = scmp.eq.s32.totalorder %s35, 26
      %p67 = por %p65, %p66
      %p68 = scmp.ne.s32.totalorder %s59, %s60
      %p69 = scmp.eq.s32.totalorder %s35, 0
      %p70 = por %p68, %p69
      %p71 = scmp.ne.s32.totalorder %s59, %s60
      %p72 = scmp.eq.s32.totalorder %s36, 26
      %p73 = por %p71, %p72
      %p75 = scmp.ne.s32.totalorder %s60, %s74
      %p76 = scmp.eq.s32.totalorder %s36, 0
      %p77 = por %p75, %p76
      %s78 = ssub.s32 %s37, %s56
      %s79 = ssub.s32 %s38, %s52
      %s80 = sor.u32 %s78, %s79
      %s81 = ssub.s32 %s39, %s48
      %s82 = sor.u32 %s80, %s81
      %p83 = scmp.eq.s32.totalorder %s82, 0
      %s85 = sadd.s32 %s84, 1
      %s86 = scalar_select %p83, %s84, %s85
      %p89 = pneg %p83
      %p90 = scmp.eq.s32.totalorder %s30, 26
      %p91 = por %p89, %p90
      %p92 = scmp.ne.s32.totalorder %s84, %s87
      %p93 = scmp.eq.s32.totalorder %s30, 0
      %p94 = por %p92, %p93
      %p95 = scmp.ne.s32.totalorder %s84, %s87
      %p96 = scmp.eq.s32.totalorder %s35, 26
      %p97 = por %p95, %p96
      %p98 = scmp.ne.s32.totalorder %s87, %s88
      %p99 = scmp.eq.s32.totalorder %s35, 0
      %p100 = por %p98, %p99
      %p101 = scmp.ne.s32.totalorder %s87, %s88
      %p102 = scmp.eq.s32.totalorder %s36, 26
      %p103 = por %p101, %p102
      %p105 = scmp.ne.s32.totalorder %s88, %s104
      %p106 = scmp.eq.s32.totalorder %s36, 0
      %p107 = por %p105, %p106
      %s108 = ssub.s32 %s37, %s56
      %s109 = ssub.s32 %s39, %s48
      %s110 = sor.u32 %s108, %s109
      %p111 = scmp.eq.s32.totalorder %s110, 0
      %s113 = sadd.s32 %s112, 1
      %s114 = scalar_select %p111, %s112, %s113
      %p117 = pneg %p111
      %p118 = scmp.eq.s32.totalorder %s30, 26
      %p119 = por %p117, %p118
      %p120 = scmp.ne.s32.totalorder %s112, %s115
      %p121 = scmp.eq.s32.totalorder %s30, 0
      %p122 = por %p120, %p121
      %p123 = scmp.ne.s32.totalorder %s112, %s115
      %p124 = scmp.eq.s32.totalorder %s35, 26
      %p125 = por %p123, %p124
      %p126 = scmp.ne.s32.totalorder %s115, %s116
      %p127 = scmp.eq.s32.totalorder %s35, 0
      %p128 = por %p126, %p127
      %p129 = scmp.ne.s32.totalorder %s115, %s116
      %p130 = scmp.eq.s32.totalorder %s36, 26
      %p131 = por %p129, %p130
      %p133 = scmp.ne.s32.totalorder %s116, %s132
      %p134 = scmp.eq.s32.totalorder %s36, 0
      %p135 = por %p133, %p134
      %s136 = ssub.s32 %s37, %s56
      %p137 = scmp.eq.s32.totalorder %s136, 0
      %s139 = sadd.s32 %s138, 1
      %s140 = scalar_select %p137, %s138, %s139
      %p143 = pneg %p137
      %p144 = scmp.eq.s32.totalorder %s30, 26
      %p145 = por %p143, %p144
      %p146 = scmp.ne.s32.totalorder %s138, %s141
      %p147 = scmp.eq.s32.totalorder %s30, 0
      %p148 = por %p146, %p147
      %p149 = scmp.ne.s32.totalorder %s138, %s141
      %p150 = scmp.eq.s32.totalorder %s35, 26
      %p151 = por %p149, %p150
      %p152 = scmp.ne.s32.totalorder %s141, %s142
      %p153 = scmp.eq.s32.totalorder %s35, 0
      %p154 = por %p152, %p153
      %p155 = scmp.ne.s32.totalorder %s141, %s142
      %p156 = scmp.eq.s32.totalorder %s36, 26
      %p157 = por %p155, %p156
      %p159 = scmp.ne.s32.totalorder %s142, %s158
      %p160 = scmp.eq.s32.totalorder %s36, 0
      %p161 = por %p159, %p160
      %s163 = sadd.s32 %s162, 1
      %p166 = scmp.eq.s32.totalorder %s30, 26
      %p167 = scmp.ne.s32.totalorder %s162, %s164
      %p168 = scmp.eq.s32.totalorder %s30, 0
      %p169 = por %p167, %p168
      %p170 = scmp.ne.s32.totalorder %s162, %s164
      %p171 = scmp.eq.s32.totalorder %s35, 26
      %p172 = por %p170, %p171
      %p173 = scmp.ne.s32.totalorder %s164, %s165
      %p174 = scmp.eq.s32.totalorder %s35, 0
      %p175 = por %p173, %p174
      %p176 = scmp.ne.s32.totalorder %s164, %s165
      %p177 = scmp.eq.s32.totalorder %s36, 26
      %p178 = por %p176, %p177
      %p180 = scmp.ne.s32.totalorder %s165, %s179
      %p181 = scmp.eq.s32.totalorder %s36, 0
      %p182 = por %p180, %p181
      %s184 = sadd.s32 %s183, 1
      %p187 = scmp.eq.s32.totalorder %s30, 26
      %p188 = scmp.ne.s32.totalorder %s183, %s185
      %p189 = scmp.eq.s32.totalorder %s30, 0
      %p190 = por %p188, %p189
      %p191 = scmp.ne.s32.totalorder %s183, %s185
      %p192 = scmp.eq.s32.totalorder %s35, 26
      %p193 = por %p191, %p192
      %p194 = scmp.ne.s32.totalorder %s185, %s186
      %p195 = scmp.eq.s32.totalorder %s35, 0
      %p196 = por %p194, %p195
      %p197 = scmp.ne.s32.totalorder %s185, %s186
      %p198 = scmp.eq.s32.totalorder %s36, 26
      %p199 = por %p197, %p198
      %p201 = scmp.ne.s32.totalorder %s186, %s200
      %p202 = scmp.eq.s32.totalorder %s36, 0
      %p203 = por %p201, %p202
      %s205 = sadd.s32 %s204, 1
      %p208 = scmp.eq.s32.totalorder %s30, 26
      %p209 = scmp.ne.s32.totalorder %s204, %s206
      %p210 = scmp.eq.s32.totalorder %s30, 0
      %p211 = por %p209, %p210
      %p212 = scmp.ne.s32.totalorder %s204, %s206
      %p213 = scmp.eq.s32.totalorder %s35, 26
      %p214 = por %p212, %p213
      %p215 = scmp.ne.s32.totalorder %s206, %s207
      %p216 = scmp.eq.s32.totalorder %s35, 0
      %p217 = por %p215, %p216
      %p218 = scmp.ne.s32.totalorder %s206, %s207
      %p219 = scmp.eq.s32.totalorder %s36, 26
      %p220 = por %p218, %p219
      %p222 = scmp.ne.s32.totalorder %s207, %s221
      %p223 = scmp.eq.s32.totalorder %s36, 0
      %p224 = por %p222, %p223
      %s225 = ssub.s32 %s38, %s52
      %s226 = ssub.s32 %s37, %s56
      %s227 = sor.u32 %s225, %s226
      %p228 = scmp.eq.s32.totalorder %s227, 0
      %s230 = sadd.s32 %s229, 1
      %s231 = scalar_select %p228, %s229, %s230
      %p234 = pneg %p228
      %p235 = scmp.eq.s32.totalorder %s30, 26
      %p236 = por %p234, %p235
      %p237 = scmp.ne.s32.totalorder %s229, %s232
      %p238 = scmp.eq.s32.totalorder %s30, 0
      %p239 = por %p237, %p238
      %p240 = scmp.ne.s32.totalorder %s229, %s232
      %p241 = scmp.eq.s32.totalorder %s35, 26
      %p242 = por %p240, %p241
      %p243 = scmp.ne.s32.totalorder %s232, %s233
      %p244 = scmp.eq.s32.totalorder %s35, 0
      %p245 = por %p243, %p244
      %p246 = scmp.ne.s32.totalorder %s232, %s233
      %p247 = scmp.eq.s32.totalorder %s36, 26
      %p248 = por %p246, %p247
      %p250 = scmp.ne.s32.totalorder %s233, %s249
      %p251 = scmp.eq.s32.totalorder %s36, 0
      %p252 = por %p250, %p251
      %s253 = ssub.s32 %s37, %s56
      %s254 = ssub.s32 %s38, %s52
      %s255 = sor.u32 %s253, %s254
      %p256 = scmp.eq.s32.totalorder %s255, 0
      %s258 = sadd.s32 %s257, 1
      %s259 = scalar_select %p256, %s257, %s258
      %p262 = pneg %p256
      %p263 = scmp.eq.s32.totalorder %s30, 26
      %p264 = por %p262, %p263
      %p265 = scmp.ne.s32.totalorder %s257, %s260
      %p266 = scmp.eq.s32.totalorder %s30, 0
      %p267 = por %p265, %p266
      %p268 = scmp.ne.s32.totalorder %s257, %s260
      %p269 = scmp.eq.s32.totalorder %s35, 26
      %p270 = por %p268, %p269
      %p271 = scmp.ne.s32.totalorder %s260, %s261
      %p272 = scmp.eq.s32.totalorder %s35, 0
      %p273 = por %p271, %p272
      %p274 = scmp.ne.s32.totalorder %s260, %s261
      %p275 = scmp.eq.s32.totalorder %s36, 26
      %p276 = por %p274, %p275
      %p278 = scmp.ne.s32.totalorder %s261, %s277
      %p279 = scmp.eq.s32.totalorder %s36, 0
      %p280 = por %p278, %p279
      %p281 = scmp.le.s32.totalorder 1, %s30
      %p282 = scmp.lt.s32.totalorder %s30, 28
      %p283 = pnand %p281, %p282
      %p284 = pneg %p283
      // Predicated region
      $region9: #{tpu_custom_call.1} parent=5 // pred_check
        _
      $region10: #{tpu_custom_call.1} parent=5 // pred_check_branch
        %286 = sbr.rel (%p283) target = $region12
      $region11: #{tpu_custom_call.1} parent=5 // pred_region
        %s287 = ssub.s32 %s30, 1
        // Predicated region
        $region13: #{tpu_custom_call.1} parent=11 // pred_check
          %p288 = pneg %p70
        $region14: #{tpu_custom_call.1} parent=11 // pred_check_branch
          %290 = sbr.rel (%p288) target = $region16
        $region15: #{tpu_custom_call.1} parent=11 // pred_region
          %s292 = ssub.s32 16, 16
          %293 = vsyncadd [#allocation6], %s292
          %296 = dma.hbm_to_smem %s0, 16, [#allocation3], [#allocation6]
        $region16: #{tpu_custom_call.1} parent=11 // pred_fallthru
          _
        // Predicated region
        $region17: #{tpu_custom_call.1} parent=11 // pred_check
          %p297 = pneg %p175
        $region18: #{tpu_custom_call.1} parent=11 // pred_check_branch
          %299 = sbr.rel (%p297) target = $region20
        $region19: #{tpu_custom_call.1} parent=11 // pred_region
          %s301 = ssub.s32 2048, 2048
          %302 = vsyncadd [#allocation12], %s301
          %s303 = sshll.u32 [#allocation11], 4
          %s304 = int_to_ptr.vmem [resolvable:$true] %s303
          %309 = dma.hbm_to_vmem [thread:$0]  %s4, 2048, %s304, [#allocation12], 128, 128, 8
        $region20: #{tpu_custom_call.1} parent=11 // pred_fallthru
          _
        // Predicated region
        $region21: #{tpu_custom_call.1} parent=11 // pred_check
          %p310 = pneg %p196
        $region22: #{tpu_custom_call.1} parent=11 // pred_check_branch
          %312 = sbr.rel (%p310) target = $region24
        $region23: #{tpu_custom_call.1} parent=11 // pred_region
          %s314 = ssub.s32 16, 16
          %315 = vsyncadd [#allocation12], %s314
          %s317 = sshll.u32 [#allocation13], 4
          %s318 = int_to_ptr.vmem [resolvable:$true] %s317
          %320 = dma.hbm_to_vmem [thread:$0]  %s5, 16, %s318, [#allocation12]
        $region24: #{tpu_custom_call.1} parent=11 // pred_fallthru
          _
        // Predicated region
        $region25: #{tpu_custom_call.1} parent=11 // pred_check
          %p321 = pneg %p217
        $region26: #{tpu_custom_call.1} parent=11 // pred_check_branch
          %323 = sbr.rel (%p321) target = $region28
        $region27: #{tpu_custom_call.1} parent=11 // pred_region
          %s325 = ssub.s32 16, 16
          %326 = vsyncadd [#allocation15], %s325
          %s328 = sshll.u32 [#allocation14], 4
          %s329 = int_to_ptr.vmem [resolvable:$true] %s328
          %331 = dma.hbm_to_vmem [thread:$0]  %s6, 16, %s329, [#allocation15]
        $region28: #{tpu_custom_call.1} parent=11 // pred_fallthru
          _
      $region12: #{tpu_custom_call.1} parent=5 // pred_fallthru
        _
      %p332 = scmp.lt.s32.totalorder %s30, 27
      // Predicated region
      $region29: #{tpu_custom_call.1} parent=5 // pred_check
        %p333 = pneg %p332
      $region30: #{tpu_custom_call.1} parent=5 // pred_check_branch
        %335 = sbr.rel (%p333) target = $region32
      $region31: #{tpu_custom_call.1} parent=5 // pred_region
        // Predicated region
        $region33: #{tpu_custom_call.1} parent=31 // pred_check
          %p336 = pneg %p94
        $region34: #{tpu_custom_call.1} parent=31 // pred_check_branch
          %338 = sbr.rel (%p336) target = $region36
        $region35: #{tpu_custom_call.1} parent=31 // pred_region
          %s339 = sand.u32 %s84, 1
          %s340 = scalar_lea.sflag [#allocation4], %s339
          %s341 = sand.u32 %s84, 1
          %s342 = smul.addr %s341, 128
          %s343 = scalar_lea.vmem [#allocation7], %s342
          %s344 = smul.u32 16, %s38
          %s346 = ssub.s32 2048, 2048
          %347 = vsyncadd %s340, %s346
          %s348 = smul.addr %s344, 3
          %s349 = sadd.s32 %s39, %s348
          %s350 = smul.addr %s37, 144
          %s351 = sadd.s32 %s349, %s350
          %s352 = smul.addr %s351, 128
          %s353 = scalar_lea.hbm %s1, %s352
          %s354 = sshll.u32 %s343, 4
          %s355 = int_to_ptr.vmem [resolvable:$true] %s354
          %360 = dma.hbm_to_vmem [thread:$0]  %s353, 2048, %s355, %s340, 384, 128, 8
        $region36: #{tpu_custom_call.1} parent=31 // pred_fallthru
          _
        // Predicated region
        $region37: #{tpu_custom_call.1} parent=31 // pred_check
          %p361 = pneg %p122
        $region38: #{tpu_custom_call.1} parent=31 // pred_check_branch
          %363 = sbr.rel (%p361) target = $region40
        $region39: #{tpu_custom_call.1} parent=31 // pred_region
          %s364 = sand.u32 %s30, 1
          %s365 = scalar_lea.sflag [#allocation9], %s364
          %s366 = sand.u32 %s112, 1
          %s367 = smul.addr %s366, 128
          %s368 = scalar_lea.vmem [#allocation8], %s367
          %s369 = smul.u32 16, %s39
          %s371 = ssub.s32 2048, 2048
          %372 = vsyncadd %s365, %s371
          %s373 = smul.addr %s37, 48
          %s374 = sadd.s32 %s369, %s373
          %s375 = smul.addr %s374, 128
          %s376 = scalar_lea.hbm %s2, %s375
          %s377 = sshll.u32 %s368, 4
          %s378 = int_to_ptr.vmem [resolvable:$true] %s377
          %383 = dma.hbm_to_vmem [thread:$0]  %s376, 2048, %s378, %s365, 128, 128, 8
        $region40: #{tpu_custom_call.1} parent=31 // pred_fallthru
          _
        // Predicated region
        $region41: #{tpu_custom_call.1} parent=31 // pred_check
          %p384 = pneg %p148
        $region42: #{tpu_custom_call.1} parent=31 // pred_check_branch
          %386 = sbr.rel (%p384) target = $region44
        $region43: #{tpu_custom_call.1} parent=31 // pred_region
          %s387 = sand.u32 %s30, 1
          %s388 = scalar_lea.sflag [#allocation9], %s387
          %s389 = sand.u32 %s138, 1
          %s390 = scalar_lea.vmem [#allocation10], %s389
          %s392 = ssub.s32 16, 16
          %393 = vsyncadd %s388, %s392
          %s394 = smul.addr %s37, 16
          %s395 = scalar_lea.hbm %s3, %s394
          %s397 = sshll.u32 %s390, 4
          %s398 = int_to_ptr.vmem [resolvable:$true] %s397
          %400 = dma.hbm_to_vmem [thread:$0]  %s395, 16, %s398, %s388
        $region44: #{tpu_custom_call.1} parent=31 // pred_fallthru
          _
      $region32: #{tpu_custom_call.1} parent=5 // pred_fallthru
        _
      %p401 = scmp.le.s32.totalorder 1, %s30
      %p402 = scmp.lt.s32.totalorder %s30, 28
      %p403 = pnand %p401, %p402
      %p404 = pneg %p403
      // Predicated region
      $region45: #{tpu_custom_call.1} parent=5 // pred_check
        _
      $region46: #{tpu_custom_call.1} parent=5 // pred_check_branch
        %406 = sbr.rel (%p403) target = $region48
      $region47: #{tpu_custom_call.1} parent=5 // pred_region
        %s407 = ssub.s32 %s30, 1
        // Predicated region
        $region49: #{tpu_custom_call.1} parent=47 // pred_check
          %p408 = pneg %p70
        $region50: #{tpu_custom_call.1} parent=47 // pred_check_branch
          %410 = sbr.rel (%p408) target = $region52
        $region51: #{tpu_custom_call.1} parent=47 // pred_region
          %411 = dma.done [#allocation6], 16
        $region52: #{tpu_custom_call.1} parent=47 // pred_fallthru
          _
        %s412 = sand.u32 %s87, 1
        %s413 = scalar_lea.sflag [#allocation4], %s412
        %s414 = sand.u32 %s87, 1
        %s415 = smul.addr %s414, 128
        %s416 = scalar_lea.vmem [#allocation7], %s415
        // Predicated region
        $region53: #{tpu_custom_call.1} parent=47 // pred_check
          %p417 = pneg %p100
        $region54: #{tpu_custom_call.1} parent=47 // pred_check_branch
          %419 = sbr.rel (%p417) target = $region56
        $region55: #{tpu_custom_call.1} parent=47 // pred_region
          %420 = dma.done %s413, 2048
        $region56: #{tpu_custom_call.1} parent=47 // pred_fallthru
          _
        %s421 = sand.u32 %s35, 1
        %s422 = scalar_lea.sflag [#allocation9], %s421
        %s423 = sand.u32 %s115, 1
        %s424 = smul.addr %s423, 128
        %s425 = scalar_lea.vmem [#allocation8], %s424
        // Predicated region
        $region57: #{tpu_custom_call.1} parent=47 // pred_check
          %p426 = pneg %p128
        $region58: #{tpu_custom_call.1} parent=47 // pred_check_branch
          %428 = sbr.rel (%p426) target = $region60
        $region59: #{tpu_custom_call.1} parent=47 // pred_region
          %429 = dma.done %s422, 2048
        $region60: #{tpu_custom_call.1} parent=47 // pred_fallthru
          _
        %s430 = sand.u32 %s35, 1
        %s431 = scalar_lea.sflag [#allocation9], %s430
        %s432 = sand.u32 %s141, 1
        %s433 = scalar_lea.vmem [#allocation10], %s432
        // Predicated region
        $region61: #{tpu_custom_call.1} parent=47 // pred_check
          %p434 = pneg %p154
        $region62: #{tpu_custom_call.1} parent=47 // pred_check_branch
          %436 = sbr.rel (%p434) target = $region64
        $region63: #{tpu_custom_call.1} parent=47 // pred_region
          %437 = dma.done %s431, 16
        $region64: #{tpu_custom_call.1} parent=47 // pred_fallthru
          _
        // Predicated region
        $region65: #{tpu_custom_call.1} parent=47 // pred_check
          %p438 = pneg %p175
        $region66: #{tpu_custom_call.1} parent=47 // pred_check_branch
          %440 = sbr.rel (%p438) target = $region68
        $region67: #{tpu_custom_call.1} parent=47 // pred_region
          %441 = dma.done [#allocation12], 2048
        $region68: #{tpu_custom_call.1} parent=47 // pred_fallthru
          _
        // Predicated region
        $region69: #{tpu_custom_call.1} parent=47 // pred_check
          %p442 = pneg %p196
        $region70: #{tpu_custom_call.1} parent=47 // pred_check_branch
          %444 = sbr.rel (%p442) target = $region72
        $region71: #{tpu_custom_call.1} parent=47 // pred_region
          %445 = dma.done [#allocation12], 16
        $region72: #{tpu_custom_call.1} parent=47 // pred_fallthru
          _
        // Predicated region
        $region73: #{tpu_custom_call.1} parent=47 // pred_check
          %p446 = pneg %p217
        $region74: #{tpu_custom_call.1} parent=47 // pred_check_branch
          %448 = sbr.rel (%p446) target = $region76
        $region75: #{tpu_custom_call.1} parent=47 // pred_region
          %449 = dma.done [#allocation15], 16
        $region76: #{tpu_custom_call.1} parent=47 // pred_fallthru
          _
        %450 = sfence
        %p451 = pneg %p70
        %p452 = pneg %p67
        %s453 = sand.u32 %s87, 1
        %s454 = scalar_lea.sflag [#allocation4], %s453
        %s455 = sand.u32 %s87, 1
        %s456 = smul.addr %s455, 128
        %s457 = scalar_lea.vmem [#allocation7], %s456
        %p458 = pneg %p100
        %p459 = pneg %p97
        %s460 = sand.u32 %s35, 1
        %s461 = scalar_lea.sflag [#allocation9], %s460
        %s462 = sand.u32 %s115, 1
        %s463 = smul.addr %s462, 128
        %s464 = scalar_lea.vmem [#allocation8], %s463
        %p465 = pneg %p128
        %p466 = pneg %p125
        %s467 = sand.u32 %s35, 1
        %s468 = scalar_lea.sflag [#allocation9], %s467
        %s469 = sand.u32 %s141, 1
        %s470 = scalar_lea.vmem [#allocation10], %s469
        %p471 = pneg %p154
        %p472 = pneg %p151
        %p473 = pneg %p175
        %p474 = pneg %p172
        %p475 = pneg %p196
        %p476 = pneg %p193
        %p477 = pneg %p217
        %p478 = pneg %p214
        %p479 = pneg %p245
        %p480 = pneg %p242
        %s481 = sand.u32 %s232, 1
        %s482 = scalar_lea.sflag [#allocation5], %s481
        %s483 = sand.u32 %s232, 1
        %s484 = smul.addr %s483, 128
        %s485 = scalar_lea.vmem [#allocation16], %s484
        %p486 = pneg %p273
        %p487 = pneg %p270
        %s488 = sand.u32 %s260, 1
        %s489 = scalar_lea.sflag [#allocation18], %s488
        %s490 = sand.u32 %s260, 1
        %s491 = smul.addr %s490, 8
        %s492 = scalar_lea.vmem [#allocation17], %s491
        %s493 = smul.u32 16, %s41
        %s494 = smul.u32 16, %s42
        %p495 = scmp.eq.s32.totalorder %s42, 0
        // Predicated region
        $region77: #{tpu_custom_call.1} parent=47 // pred_check
          %p496 = pneg %p495
        $region78: #{tpu_custom_call.1} parent=47 // pred_check_branch
          %498 = sbr.rel (%p496) target = $region80
        $region79: #{tpu_custom_call.1} parent=47 // pred_region
          %499 = vst [vmem:[#allocation2] sm:$0xff] 0.0
          %500 = vst [vmem:[#allocation2 + $0x8] sm:$0xff] 0.0
          %501 = vst [vmem:[#allocation2 + $0x10] sm:$0xff] 0.0
          %502 = vst [vmem:[#allocation2 + $0x18] sm:$0xff] 0.0
          %503 = vst [vmem:[#allocation2 + $0x20] sm:$0xff] 0.0
          %504 = vst [vmem:[#allocation2 + $0x28] sm:$0xff] 0.0
          %505 = vst [vmem:[#allocation2 + $0x30] sm:$0xff] 0.0
          %506 = vst [vmem:[#allocation2 + $0x38] sm:$0xff] 0.0
          %507 = vst [vmem:[#allocation2 + $0x40] sm:$0xff] 0.0
          %508 = vst [vmem:[#allocation2 + $0x48] sm:$0xff] 0.0
          %509 = vst [vmem:[#allocation2 + $0x50] sm:$0xff] 0.0
          %510 = vst [vmem:[#allocation2 + $0x58] sm:$0xff] 0.0
          %511 = vst [vmem:[#allocation2 + $0x60] sm:$0xff] 0.0
          %512 = vst [vmem:[#allocation2 + $0x68] sm:$0xff] 0.0
          %513 = vst [vmem:[#allocation2 + $0x70] sm:$0xff] 0.0
          %514 = vst [vmem:[#allocation2 + $0x78] sm:$0xff] 0.0
        $region80: #{tpu_custom_call.1} parent=47 // pred_fallthru
          _
        %v515 = vld [vmem:[%s416] sm:$0xff]
        %v516 = vld [vmem:[%s416 + $0x8] sm:$0xff]
        %v517 = vld [vmem:[%s416 + $0x10] sm:$0xff]
        %v518 = vld [vmem:[%s416 + $0x18] sm:$0xff]
        %v519 = vld [vmem:[%s416 + $0x20] sm:$0xff]
        %v520 = vld [vmem:[%s416 + $0x28] sm:$0xff]
        %v521 = vld [vmem:[%s416 + $0x30] sm:$0xff]
        %v522 = vld [vmem:[%s416 + $0x38] sm:$0xff]
        %v523 = vld [vmem:[%s416 + $0x40] sm:$0xff]
        %v524 = vld [vmem:[%s416 + $0x48] sm:$0xff]
        %v525 = vld [vmem:[%s416 + $0x50] sm:$0xff]
        %v526 = vld [vmem:[%s416 + $0x58] sm:$0xff]
        %v527 = vld [vmem:[%s416 + $0x60] sm:$0xff]
        %v528 = vld [vmem:[%s416 + $0x68] sm:$0xff]
        %v529 = vld [vmem:[%s416 + $0x70] sm:$0xff]
        %v530 = vld [vmem:[%s416 + $0x78] sm:$0xff]
        %v531 = vld [vmem:[#allocation2] sm:$0xff]
        %v532 = vld [vmem:[#allocation2 + $0x8] sm:$0xff]
        %v533 = vld [vmem:[#allocation2 + $0x10] sm:$0xff]
        %v534 = vld [vmem:[#allocation2 + $0x18] sm:$0xff]
        %v535 = vld [vmem:[#allocation2 + $0x20] sm:$0xff]
        %v536 = vld [vmem:[#allocation2 + $0x28] sm:$0xff]
        %v537 = vld [vmem:[#allocation2 + $0x30] sm:$0xff]
        %v538 = vld [vmem:[#allocation2 + $0x38] sm:$0xff]
        %v539 = vld [vmem:[#allocation2 + $0x40] sm:$0xff]
        %v540 = vld [vmem:[#allocation2 + $0x48] sm:$0xff]
        %v541 = vld [vmem:[#allocation2 + $0x50] sm:$0xff]
        %v542 = vld [vmem:[#allocation2 + $0x58] sm:$0xff]
        %v543 = vld [vmem:[#allocation2 + $0x60] sm:$0xff]
        %v544 = vld [vmem:[#allocation2 + $0x68] sm:$0xff]
        %v545 = vld [vmem:[#allocation2 + $0x70] sm:$0xff]
        %v546 = vld [vmem:[#allocation2 + $0x78] sm:$0xff]
        %v547 = vld [vmem:[%s425] sm:$0xff]
        %v548 = vld [vmem:[%s425 + $0x8] sm:$0xff]
        %v549 = vld [vmem:[%s425 + $0x10] sm:$0xff]
        %v550 = vld [vmem:[%s425 + $0x18] sm:$0xff]
        %v551 = vld [vmem:[%s425 + $0x20] sm:$0xff]
        %v552 = vld [vmem:[%s425 + $0x28] sm:$0xff]
        %v553 = vld [vmem:[%s425 + $0x30] sm:$0xff]
        %v554 = vld [vmem:[%s425 + $0x38] sm:$0xff]
        %v555 = vld [vmem:[%s425 + $0x40] sm:$0xff]
        %v556 = vld [vmem:[%s425 + $0x48] sm:$0xff]
        %v557 = vld [vmem:[%s425 + $0x50] sm:$0xff]
        %v558 = vld [vmem:[%s425 + $0x58] sm:$0xff]
        %v559 = vld [vmem:[%s425 + $0x60] sm:$0xff]
        %v560 = vld [vmem:[%s425 + $0x68] sm:$0xff]
        %v561 = vld [vmem:[%s425 + $0x70] sm:$0xff]
        %v562 = vld [vmem:[%s425 + $0x78] sm:$0xff]
        %563 = vmatprep.subr.mxu0 0.0
        %564 = vmatpush1.msra.mxu0 %v547
        %565 = vmatprep.subr.mxu0 0.0
        %566 = vmatpush1.msra.mxu0 %v548
        %567 = vmatprep.subr.mxu0 0.0
        %568 = vmatpush1.msra.mxu0 %v549
        %569 = vmatprep.subr.mxu0 0.0
        %570 = vmatpush1.msra.mxu0 %v550
        %571 = vmatprep.subr.mxu0 0.0
        %572 = vmatpush1.msra.mxu0 %v551
        %573 = vmatprep.subr.mxu0 0.0
        %574 = vmatpush1.msra.mxu0 %v552
        %575 = vmatprep.subr.mxu0 0.0
        %576 = vmatpush1.msra.mxu0 %v553
        %577 = vmatprep.subr.mxu0 0.0
        %578 = vmatpush1.msra.mxu0 %v554
        %579 = vmatprep.subr.mxu0 0.0
        %580 = vmatpush1.msra.mxu0 %v555
        %581 = vmatprep.subr.mxu0 0.0
        %582 = vmatpush1.msra.mxu0 %v556
        %583 = vmatprep.subr.mxu0 0.0
        %584 = vmatpush1.msra.mxu0 %v557
        %585 = vmatprep.subr.mxu0 0.0
        %586 = vmatpush1.msra.mxu0 %v558
        %587 = vmatprep.subr.mxu0 0.0
        %588 = vmatpush1.msra.mxu0 %v559
        %589 = vmatprep.subr.mxu0 0.0
        %590 = vmatpush1.msra.mxu0 %v560
        %591 = vmatprep.subr.mxu0 0.0
        %592 = vmatpush1.msra.mxu0 %v561
        %593 = vmatprep.subr.mxu0 0.0
        %594 = vmatpush1.msra.mxu0 %v562
        %595 = vmatprep.subr.mxu0 0.0
        %596 = vmatpush1.msra.mxu0 0.0
        %597 = vmatprep.subr.mxu0 0.0
        %598 = vmatpush1.msra.mxu0 0.0
        %599 = vmatprep.subr.mxu0 0.0
        %600 = vmatpush1.msra.mxu0 0.0
        %601 = vmatprep.subr.mxu0 0.0
        %602 = vmatpush1.msra.mxu0 0.0
        %603 = vmatprep.subr.mxu0 0.0
        %604 = vmatpush1.msra.mxu0 0.0
        %605 = vmatprep.subr.mxu0 0.0
        %606 = vmatpush1.msra.mxu0 0.0
        %607 = vmatprep.subr.mxu0 0.0
        %608 = vmatpush1.msra.mxu0 0.0
        %609 = vmatprep.subr.mxu0 0.0
        %610 = vmatpush1.msra.mxu0 0.0
        %611 = vmatprep.subr.mxu0 0.0
        %612 = vmatpush1.msra.mxu0 0.0
        %613 = vmatprep.subr.mxu0 0.0
        %614 = vmatpush1.msra.mxu0 0.0
        %615 = vmatprep.subr.mxu0 0.0
        %616 = vmatpush1.msra.mxu0 0.0
        %617 = vmatprep.subr.mxu0 0.0
        %618 = vmatpush1.msra.mxu0 0.0
        %619 = vmatprep.subr.mxu0 0.0
        %620 = vmatpush1.msra.mxu0 0.0
        %621 = vmatprep.subr.mxu0 0.0
        %622 = vmatpush1.msra.mxu0 0.0
        %623 = vmatprep.subr.mxu0 0.0
        %624 = vmatpush1.msra.mxu0 0.0
        %625 = vmatprep.subr.mxu0 0.0
        %626 = vmatpush1.msra.mxu0 0.0
        %627 = vmatprep.mubr.f32.mxu0 0.0
        %628 = vmatmul.mubr.f32.gmra.mrb[0].mxu0 %v515
        %v629 = vpop.f32.mrb[0].mxu0
        %v630 = vadd.f32 0.0, %v629
        %v631 = vpop.f32.mrb[0].mxu0
        %632 = vmatprep.mubr.f32.mxu0 0.0
        %633 = vmatmul.mubr.f32.gmra.mrb[0].mxu0 %v516
        %v634 = vpop.f32.mrb[0].mxu0
        %v635 = vadd.f32 0.0, %v634
        %v636 = vpop.f32.mrb[0].mxu0
        %637 = vmatprep.mubr.f32.mxu0 0.0
        %638 = vmatmul.mubr.f32.gmra.mrb[0].mxu0 %v517
        %v639 = vpop.f32.mrb[0].mxu0
        %v640 = vadd.f32 0.0, %v639
        %v641 = vpop.f32.mrb[0].mxu0
        %642 = vmatprep.mubr.f32.mxu0 0.0
        %643 = vmatmul.mubr.f32.gmra.mrb[0].mxu0 %v518
        %v644 = vpop.f32.mrb[0].mxu0
        %v645 = vadd.f32 0.0, %v644
        %v646 = vpop.f32.mrb[0].mxu0
        %647 = vmatprep.mubr.f32.mxu0 0.0
        %648 = vmatmul.mubr.f32.gmra.mrb[0].mxu0 %v519
        %v649 = vpop.f32.mrb[0].mxu0
        %v650 = vadd.f32 0.0, %v649
        %v651 = vpop.f32.mrb[0].mxu0
        %652 = vmatprep.mubr.f32.mxu0 0.0
        %653 = vmatmul.mubr.f32.gmra.mrb[0].mxu0 %v520
        %v654 = vpop.f32.mrb[0].mxu0
        %v655 = vadd.f32 0.0, %v654
        %v656 = vpop.f32.mrb[0].mxu0
        %657 = vmatprep.mubr.f32.mxu0 0.0
        %658 = vmatmul.mubr.f32.gmra.mrb[0].mxu0 %v521
        %v659 = vpop.f32.mrb[0].mxu0
        %v660 = vadd.f32 0.0, %v659
        %v661 = vpop.f32.mrb[0].mxu0
        %662 = vmatprep.mubr.f32.mxu0 0.0
        %663 = vmatmul.mubr.f32.gmra.mrb[0].mxu0 %v522
        %v664 = vpop.f32.mrb[0].mxu0
        %v665 = vadd.f32 0.0, %v664
        %v666 = vpop.f32.mrb[0].mxu0
        %667 = vmatprep.mubr.f32.mxu0 0.0
        %668 = vmatmul.mubr.f32.gmra.mrb[0].mxu0 %v523
        %v669 = vpop.f32.mrb[0].mxu0
        %v670 = vadd.f32 0.0, %v669
        %v671 = vpop.f32.mrb[0].mxu0
        %672 = vmatprep.mubr.f32.mxu0 0.0
        %673 = vmatmul.mubr.f32.gmra.mrb[0].mxu0 %v524
        %v674 = vpop.f32.mrb[0].mxu0
        %v675 = vadd.f32 0.0, %v674
        %v676 = vpop.f32.mrb[0].mxu0
        %677 = vmatprep.mubr.f32.mxu0 0.0
        %678 = vmatmul.mubr.f32.gmra.mrb[0].mxu0 %v525
        %v679 = vpop.f32.mrb[0].mxu0
        %v680 = vadd.f32 0.0, %v679
        %v681 = vpop.f32.mrb[0].mxu0
        %682 = vmatprep.mubr.f32.mxu0 0.0
        %683 = vmatmul.mubr.f32.gmra.mrb[0].mxu0 %v526
        %v684 = vpop.f32.mrb[0].mxu0
        %v685 = vadd.f32 0.0, %v684
        %v686 = vpop.f32.mrb[0].mxu0
        %687 = vmatprep.mubr.f32.mxu0 0.0
        %688 = vmatmul.mubr.f32.gmra.mrb[0].mxu0 %v527
        %v689 = vpop.f32.mrb[0].mxu0
        %v690 = vadd.f32 0.0, %v689
        %v691 = vpop.f32.mrb[0].mxu0
        %692 = vmatprep.mubr.f32.mxu0 0.0
        %693 = vmatmul.mubr.f32.gmra.mrb[0].mxu0 %v528
        %v694 = vpop.f32.mrb[0].mxu0
        %v695 = vadd.f32 0.0, %v694
        %v696 = vpop.f32.mrb[0].mxu0
        %697 = vmatprep.mubr.f32.mxu0 0.0
        %698 = vmatmul.mubr.f32.gmra.mrb[0].mxu0 %v529
        %v699 = vpop.f32.mrb[0].mxu0
        %v700 = vadd.f32 0.0, %v699
        %v701 = vpop.f32.mrb[0].mxu0
        %702 = vmatprep.mubr.f32.mxu0 0.0
        %703 = vmatmul.mubr.f32.gmra.mrb[0].mxu0 %v530
        %v704 = vpop.f32.mrb[0].mxu0
        %v705 = vadd.f32 0.0, %v704
        %v706 = vpop.f32.mrb[0].mxu0
        %707 = vdwg.mxu0
        %v708 = vadd.f32 %v531, %v630
        %v709 = vadd.f32 %v532, %v635
        %v710 = vadd.f32 %v533, %v640
        %v711 = vadd.f32 %v534, %v645
        %v712 = vadd.f32 %v535, %v650
        %v713 = vadd.f32 %v536, %v655
        %v714 = vadd.f32 %v537, %v660
        %v715 = vadd.f32 %v538, %v665
        %v716 = vadd.f32 %v539, %v670
        %v717 = vadd.f32 %v540, %v675
        %v718 = vadd.f32 %v541, %v680
        %v719 = vadd.f32 %v542, %v685
        %v720 = vadd.f32 %v543, %v690
        %v721 = vadd.f32 %v544, %v695
        %v722 = vadd.f32 %v545, %v700
        %v723 = vadd.f32 %v546, %v705
        %724 = vst [vmem:[#allocation2] sm:$0xff] %v708
        %725 = vst [vmem:[#allocation2 + $0x8] sm:$0xff] %v709
        %726 = vst [vmem:[#allocation2 + $0x10] sm:$0xff] %v710
        %727 = vst [vmem:[#allocation2 + $0x18] sm:$0xff] %v711
        %728 = vst [vmem:[#allocation2 + $0x20] sm:$0xff] %v712
        %729 = vst [vmem:[#allocation2 + $0x28] sm:$0xff] %v713
        %730 = vst [vmem:[#allocation2 + $0x30] sm:$0xff] %v714
        %731 = vst [vmem:[#allocation2 + $0x38] sm:$0xff] %v715
        %732 = vst [vmem:[#allocation2 + $0x40] sm:$0xff] %v716
        %733 = vst [vmem:[#allocation2 + $0x48] sm:$0xff] %v717
        %734 = vst [vmem:[#allocation2 + $0x50] sm:$0xff] %v718
        %735 = vst [vmem:[#allocation2 + $0x58] sm:$0xff] %v719
        %736 = vst [vmem:[#allocation2 + $0x60] sm:$0xff] %v720
        %737 = vst [vmem:[#allocation2 + $0x68] sm:$0xff] %v721
        %738 = vst [vmem:[#allocation2 + $0x70] sm:$0xff] %v722
        %739 = vst [vmem:[#allocation2 + $0x78] sm:$0xff] %v723
        %p740 = scmp.eq.s32.totalorder %s42, 2
        // Predicated region
        $region81: #{tpu_custom_call.1} parent=47 // pred_check
          %p741 = pneg %p740
        $region82: #{tpu_custom_call.1} parent=47 // pred_check_branch
          %743 = sbr.rel (%p741) target = $region84
        $region83: #{tpu_custom_call.1} parent=47 // pred_region
          %v744 = vld [vmem:[#allocation2] sm:$0xff]
          %v745 = vld [vmem:[#allocation2 + $0x8] sm:$0xff]
          %v746 = vld [vmem:[#allocation2 + $0x10] sm:$0xff]
          %v747 = vld [vmem:[#allocation2 + $0x18] sm:$0xff]
          %v748 = vld [vmem:[#allocation2 + $0x20] sm:$0xff]
          %v749 = vld [vmem:[#allocation2 + $0x28] sm:$0xff]
          %v750 = vld [vmem:[#allocation2 + $0x30] sm:$0xff]
          %v751 = vld [vmem:[#allocation2 + $0x38] sm:$0xff]
          %v752 = vld [vmem:[#allocation2 + $0x40] sm:$0xff]
          %v753 = vld [vmem:[#allocation2 + $0x48] sm:$0xff]
          %v754 = vld [vmem:[#allocation2 + $0x50] sm:$0xff]
          %v755 = vld [vmem:[#allocation2 + $0x58] sm:$0xff]
          %v756 = vld [vmem:[#allocation2 + $0x60] sm:$0xff]
          %v757 = vld [vmem:[#allocation2 + $0x68] sm:$0xff]
          %v758 = vld [vmem:[#allocation2 + $0x70] sm:$0xff]
          %v759 = vld [vmem:[#allocation2 + $0x78] sm:$0xff]
          %v760 = vld [vmem:[%s433] sm:$0x1]
          %v762 = vlaneseq
          %v763 = vshrl.u32 %v762, 7
          %v764 = vsub.s32 0, %v763
          %v765 = vrot.slane %v760, %v764
          %v767 = vadd.f32 %v744, %v765
          %v768 = vadd.f32 %v745, %v765
          %v769 = vadd.f32 %v746, %v765
          %v770 = vadd.f32 %v747, %v765
          %v771 = vadd.f32 %v748, %v765
          %v772 = vadd.f32 %v749, %v765
          %v773 = vadd.f32 %v750, %v765
          %v774 = vadd.f32 %v751, %v765
          %v775 = vadd.f32 %v752, %v765
          %v776 = vadd.f32 %v753, %v765
          %v777 = vadd.f32 %v754, %v765
          %v778 = vadd.f32 %v755, %v765
          %v779 = vadd.f32 %v756, %v765
          %v780 = vadd.f32 %v757, %v765
          %v781 = vadd.f32 %v758, %v765
          %v782 = vadd.f32 %v759, %v765
          %s783 = sld [smem:[#allocation3 + %s40]]
          %vm784 = vcmp.gt.f32.partialorder %v767, 0.0
          %vm785 = vcmp.gt.f32.partialorder %v768, 0.0
          %vm786 = vcmp.gt.f32.partialorder %v769, 0.0
          %vm787 = vcmp.gt.f32.partialorder %v770, 0.0
          %vm788 = vcmp.gt.f32.partialorder %v771, 0.0
          %vm789 = vcmp.gt.f32.partialorder %v772, 0.0
          %vm790 = vcmp.gt.f32.partialorder %v773, 0.0
          %vm791 = vcmp.gt.f32.partialorder %v774, 0.0
          %vm792 = vcmp.gt.f32.partialorder %v775, 0.0
          %vm793 = vcmp.gt.f32.partialorder %v776, 0.0
          %vm794 = vcmp.gt.f32.partialorder %v777, 0.0
          %vm795 = vcmp.gt.f32.partialorder %v778, 0.0
          %vm796 = vcmp.gt.f32.partialorder %v779, 0.0
          %vm797 = vcmp.gt.f32.partialorder %v780, 0.0
          %vm798 = vcmp.gt.f32.partialorder %v781, 0.0
          %vm799 = vcmp.gt.f32.partialorder %v782, 0.0
          %v800 = vstv %s783
          %v801 = vmul.f32 %v767, %v800
          %v802 = vmul.f32 %v768, %v800
          %v803 = vmul.f32 %v769, %v800
          %v804 = vmul.f32 %v770, %v800
          %v805 = vmul.f32 %v771, %v800
          %v806 = vmul.f32 %v772, %v800
          %v807 = vmul.f32 %v773, %v800
          %v808 = vmul.f32 %v774, %v800
          %v809 = vmul.f32 %v775, %v800
          %v810 = vmul.f32 %v776, %v800
          %v811 = vmul.f32 %v777, %v800
          %v812 = vmul.f32 %v778, %v800
          %v813 = vmul.f32 %v779, %v800
          %v814 = vmul.f32 %v780, %v800
          %v815 = vmul.f32 %v781, %v800
          %v816 = vmul.f32 %v782, %v800
          %v817 = vsel %vm784, %v767, %v801
          %v818 = vsel %vm785, %v768, %v802
          %v819 = vsel %vm786, %v769, %v803
          %v820 = vsel %vm787, %v770, %v804
          %v821 = vsel %vm788, %v771, %v805
          %v822 = vsel %vm789, %v772, %v806
          %v823 = vsel %vm790, %v773, %v807
          %v824 = vsel %vm791, %v774, %v808
          %v825 = vsel %vm792, %v775, %v809
          %v826 = vsel %vm793, %v776, %v810
          %v827 = vsel %vm794, %v777, %v811
          %v828 = vsel %vm795, %v778, %v812
          %v829 = vsel %vm796, %v779, %v813
          %v830 = vsel %vm797, %v780, %v814
          %v831 = vsel %vm798, %v781, %v815
          %v832 = vsel %vm799, %v782, %v816
          %833 = vst [vmem:[%s485] sm:$0xff] %v817
          %834 = vst [vmem:[%s485 + $0x8] sm:$0xff] %v818
          %835 = vst [vmem:[%s485 + $0x10] sm:$0xff] %v819
          %836 = vst [vmem:[%s485 + $0x18] sm:$0xff] %v820
          %837 = vst [vmem:[%s485 + $0x20] sm:$0xff] %v821
          %838 = vst [vmem:[%s485 + $0x28] sm:$0xff] %v822
          %839 = vst [vmem:[%s485 + $0x30] sm:$0xff] %v823
          %840 = vst [vmem:[%s485 + $0x38] sm:$0xff] %v824
          %841 = vst [vmem:[%s485 + $0x40] sm:$0xff] %v825
          %842 = vst [vmem:[%s485 + $0x48] sm:$0xff] %v826
          %843 = vst [vmem:[%s485 + $0x50] sm:$0xff] %v827
          %844 = vst [vmem:[%s485 + $0x58] sm:$0xff] %v828
          %845 = vst [vmem:[%s485 + $0x60] sm:$0xff] %v829
          %846 = vst [vmem:[%s485 + $0x68] sm:$0xff] %v830
          %847 = vst [vmem:[%s485 + $0x70] sm:$0xff] %v831
          %848 = vst [vmem:[%s485 + $0x78] sm:$0xff] %v832
          %v849 = vld [vmem:[#allocation11] sm:$0xff]
          %v850 = vld [vmem:[#allocation11 + $0x8] sm:$0xff]
          %v851 = vld [vmem:[#allocation11 + $0x10] sm:$0xff]
          %v852 = vld [vmem:[#allocation11 + $0x18] sm:$0xff]
          %v853 = vld [vmem:[#allocation11 + $0x20] sm:$0xff]
          %v854 = vld [vmem:[#allocation11 + $0x28] sm:$0xff]
          %v855 = vld [vmem:[#allocation11 + $0x30] sm:$0xff]
          %v856 = vld [vmem:[#allocation11 + $0x38] sm:$0xff]
          %v857 = vld [vmem:[#allocation11 + $0x40] sm:$0xff]
          %v858 = vld [vmem:[#allocation11 + $0x48] sm:$0xff]
          %v859 = vld [vmem:[#allocation11 + $0x50] sm:$0xff]
          %v860 = vld [vmem:[#allocation11 + $0x58] sm:$0xff]
          %v861 = vld [vmem:[#allocation11 + $0x60] sm:$0xff]
          %v862 = vld [vmem:[#allocation11 + $0x68] sm:$0xff]
          %v863 = vld [vmem:[#allocation11 + $0x70] sm:$0xff]
          %v864 = vld [vmem:[#allocation11 + $0x78] sm:$0xff]
          %v865 = vld [vmem:[#allocation13] sm:$0x1]
          %v867 = vlaneseq
          %v868 = vshrl.u32 %v867, 7
          %v869 = vsub.s32 0, %v868
          %v870 = vrot.slane %v865, %v869
          %872 = vmatprep.subr.mxu0 0.0
          %873 = vmatpush1.msra.mxu0 %v849
          %874 = vmatprep.subr.mxu0 0.0
          %875 = vmatpush1.msra.mxu0 %v850
          %876 = vmatprep.subr.mxu0 0.0
          %877 = vmatpush1.msra.mxu0 %v851
          %878 = vmatprep.subr.mxu0 0.0
          %879 = vmatpush1.msra.mxu0 %v852
          %880 = vmatprep.subr.mxu0 0.0
          %881 = vmatpush1.msra.mxu0 %v853
          %882 = vmatprep.subr.mxu0 0.0
          %883 = vmatpush1.msra.mxu0 %v854
          %884 = vmatprep.subr.mxu0 0.0
          %885 = vmatpush1.msra.mxu0 %v855
          %886 = vmatprep.subr.mxu0 0.0
          %887 = vmatpush1.msra.mxu0 %v856
          %888 = vmatprep.subr.mxu0 0.0
          %889 = vmatpush1.msra.mxu0 %v857
          %890 = vmatprep.subr.mxu0 0.0
          %891 = vmatpush1.msra.mxu0 %v858
          %892 = vmatprep.subr.mxu0 0.0
          %893 = vmatpush1.msra.mxu0 %v859
          %894 = vmatprep.subr.mxu0 0.0
          %895 = vmatpush1.msra.mxu0 %v860
          %896 = vmatprep.subr.mxu0 0.0
          %897 = vmatpush1.msra.mxu0 %v861
          %898 = vmatprep.subr.mxu0 0.0
          %899 = vmatpush1.msra.mxu0 %v862
          %900 = vmatprep.subr.mxu0 0.0
          %901 = vmatpush1.msra.mxu0 %v863
          %902 = vmatprep.subr.mxu0 0.0
          %903 = vmatpush1.msra.mxu0 %v864
          %904 = vmatprep.subr.mxu0 0.0
          %905 = vmatpush1.msra.mxu0 0.0
          %906 = vmatprep.subr.mxu0 0.0
          %907 = vmatpush1.msra.mxu0 0.0
          %908 = vmatprep.subr.mxu0 0.0
          %909 = vmatpush1.msra.mxu0 0.0
          %910 = vmatprep.subr.mxu0 0.0
          %911 = vmatpush1.msra.mxu0 0.0
          %912 = vmatprep.subr.mxu0 0.0
          %913 = vmatpush1.msra.mxu0 0.0
          %914 = vmatprep.subr.mxu0 0.0
          %915 = vmatpush1.msra.mxu0 0.0
          %916 = vmatprep.subr.mxu0 0.0
          %917 = vmatpush1.msra.mxu0 0.0
          %918 = vmatprep.subr.mxu0 0.0
          %919 = vmatpush1.msra.mxu0 0.0
          %920 = vmatprep.subr.mxu0 0.0
          %921 = vmatpush1.msra.mxu0 0.0
          %922 = vmatprep.subr.mxu0 0.0
          %923 = vmatpush1.msra.mxu0 0.0
          %924 = vmatprep.subr.mxu0 0.0
          %925 = vmatpush1.msra.mxu0 0.0
          %926 = vmatprep.subr.mxu0 0.0
          %927 = vmatpush1.msra.mxu0 0.0
          %928 = vmatprep.subr.mxu0 0.0
          %929 = vmatpush1.msra.mxu0 0.0
          %930 = vmatprep.subr.mxu0 0.0
          %931 = vmatpush1.msra.mxu0 0.0
          %932 = vmatprep.subr.mxu0 0.0
          %933 = vmatpush1.msra.mxu0 0.0
          %934 = vmatprep.subr.mxu0 0.0
          %935 = vmatpush1.msra.mxu0 0.0
          %936 = vmatprep.mubr.f32.mxu0 0.0
          %937 = vmatmul.mubr.f32.gmra.mrb[0].mxu0 %v817
          %v938 = vpop.f32.mrb[0].mxu0
          %v939 = vadd.f32 %v870, %v938
          %v940 = vpop.f32.mrb[0].mxu0
          %941 = vmatprep.mubr.f32.mxu0 0.0
          %942 = vmatmul.mubr.f32.gmra.mrb[0].mxu0 %v818
          %v943 = vpop.f32.mrb[0].mxu0
          %v944 = vadd.f32 %v870, %v943
          %v945 = vpop.f32.mrb[0].mxu0
          %946 = vmatprep.mubr.f32.mxu0 0.0
          %947 = vmatmul.mubr.f32.gmra.mrb[0].mxu0 %v819
          %v948 = vpop.f32.mrb[0].mxu0
          %v949 = vadd.f32 %v870, %v948
          %v950 = vpop.f32.mrb[0].mxu0
          %951 = vmatprep.mubr.f32.mxu0 0.0
          %952 = vmatmul.mubr.f32.gmra.mrb[0].mxu0 %v820
          %v953 = vpop.f32.mrb[0].mxu0
          %v954 = vadd.f32 %v870, %v953
          %v955 = vpop.f32.mrb[0].mxu0
          %956 = vmatprep.mubr.f32.mxu0 0.0
          %957 = vmatmul.mubr.f32.gmra.mrb[0].mxu0 %v821
          %v958 = vpop.f32.mrb[0].mxu0
          %v959 = vadd.f32 %v870, %v958
          %v960 = vpop.f32.mrb[0].mxu0
          %961 = vmatprep.mubr.f32.mxu0 0.0
          %962 = vmatmul.mubr.f32.gmra.mrb[0].mxu0 %v822
          %v963 = vpop.f32.mrb[0].mxu0
          %v964 = vadd.f32 %v870, %v963
          %v965 = vpop.f32.mrb[0].mxu0
          %966 = vmatprep.mubr.f32.mxu0 0.0
          %967 = vmatmul.mubr.f32.gmra.mrb[0].mxu0 %v823
          %v968 = vpop.f32.mrb[0].mxu0
          %v969 = vadd.f32 %v870, %v968
          %v970 = vpop.f32.mrb[0].mxu0
          %971 = vmatprep.mubr.f32.mxu0 0.0
          %972 = vmatmul.mubr.f32.gmra.mrb[0].mxu0 %v824
          %v973 = vpop.f32.mrb[0].mxu0
          %v974 = vadd.f32 %v870, %v973
          %v975 = vpop.f32.mrb[0].mxu0
          %976 = vmatprep.mubr.f32.mxu0 0.0
          %977 = vmatmul.mubr.f32.gmra.mrb[0].mxu0 %v825
          %v978 = vpop.f32.mrb[0].mxu0
          %v979 = vadd.f32 %v870, %v978
          %v980 = vpop.f32.mrb[0].mxu0
          %981 = vmatprep.mubr.f32.mxu0 0.0
          %982 = vmatmul.mubr.f32.gmra.mrb[0].mxu0 %v826
          %v983 = vpop.f32.mrb[0].mxu0
          %v984 = vadd.f32 %v870, %v983
          %v985 = vpop.f32.mrb[0].mxu0
          %986 = vmatprep.mubr.f32.mxu0 0.0
          %987 = vmatmul.mubr.f32.gmra.mrb[0].mxu0 %v827
          %v988 = vpop.f32.mrb[0].mxu0
          %v989 = vadd.f32 %v870, %v988
          %v990 = vpop.f32.mrb[0].mxu0
          %991 = vmatprep.mubr.f32.mxu0 0.0
          %992 = vmatmul.mubr.f32.gmra.mrb[0].mxu0 %v828
          %v993 = vpop.f32.mrb[0].mxu0
          %v994 = vadd.f32 %v870, %v993
          %v995 = vpop.f32.mrb[0].mxu0
          %996 = vmatprep.mubr.f32.mxu0 0.0
          %997 = vmatmul.mubr.f32.gmra.mrb[0].mxu0 %v829
          %v998 = vpop.f32.mrb[0].mxu0
          %v999 = vadd.f32 %v870, %v998
          %v1000 = vpop.f32.mrb[0].mxu0
          %1001 = vmatprep.mubr.f32.mxu0 0.0
          %1002 = vmatmul.mubr.f32.gmra.mrb[0].mxu0 %v830
          %v1003 = vpop.f32.mrb[0].mxu0
          %v1004 = vadd.f32 %v870, %v1003
          %v1005 = vpop.f32.mrb[0].mxu0
          %1006 = vmatprep.mubr.f32.mxu0 0.0
          %1007 = vmatmul.mubr.f32.gmra.mrb[0].mxu0 %v831
          %v1008 = vpop.f32.mrb[0].mxu0
          %v1009 = vadd.f32 %v870, %v1008
          %v1010 = vpop.f32.mrb[0].mxu0
          %1011 = vmatprep.mubr.f32.mxu0 0.0
          %1012 = vmatmul.mubr.f32.gmra.mrb[0].mxu0 %v832
          %v1013 = vpop.f32.mrb[0].mxu0
          %v1014 = vadd.f32 %v870, %v1013
          %v1015 = vpop.f32.mrb[0].mxu0
          %1016 = vdwg.mxu0
          %v1017 = vtanh.pop %v939
          %v1018 = vtanh.pop %v944
          %v1019 = vtanh.pop %v949
          %v1020 = vtanh.pop %v954
          %v1021 = vtanh.pop %v959
          %v1022 = vtanh.pop %v964
          %v1023 = vtanh.pop %v969
          %v1024 = vtanh.pop %v974
          %v1025 = vtanh.pop %v979
          %v1026 = vtanh.pop %v984
          %v1027 = vtanh.pop %v989
          %v1028 = vtanh.pop %v994
          %v1029 = vtanh.pop %v999
          %v1030 = vtanh.pop %v1004
          %v1031 = vtanh.pop %v1009
          %v1032 = vtanh.pop %v1014
          %v1033 = vlaneseq
          %v1034 = vshrl.u32 %v1033, 7
          %v1035 = vadd.s32 %v1034, 8
          %v1036 = vadd.s32 %v1034, 16
          %v1037 = vadd.s32 %v1034, 24
          %v1038 = vadd.s32 %v1034, 32
          %v1039 = vadd.s32 %v1034, 40
          %v1040 = vadd.s32 %v1034, 48
          %v1041 = vadd.s32 %v1034, 56
          %v1042 = vadd.s32 %v1034, 64
          %v1043 = vadd.s32 %v1034, 72
          %v1044 = vadd.s32 %v1034, 80
          %v1045 = vadd.s32 %v1034, 88
          %v1046 = vadd.s32 %v1034, 96
          %v1047 = vadd.s32 %v1034, 104
          %v1048 = vadd.s32 %v1034, 112
          %v1049 = vadd.s32 %v1034, 120
          %s1050 = smul.u32 %s41, 128
          %v1051 = vstv %s1050
          %v1052 = vadd.s32 %v1034, %v1051
          %v1053 = vadd.s32 %v1035, %v1051
          %v1054 = vadd.s32 %v1036, %v1051
          %v1055 = vadd.s32 %v1037, %v1051
          %v1056 = vadd.s32 %v1038, %v1051
          %v1057 = vadd.s32 %v1039, %v1051
          %v1058 = vadd.s32 %v1040, %v1051
          %v1059 = vadd.s32 %v1041, %v1051
          %v1060 = vadd.s32 %v1042, %v1051
          %v1061 = vadd.s32 %v1043, %v1051
          %v1062 = vadd.s32 %v1044, %v1051
          %v1063 = vadd.s32 %v1045, %v1051
          %v1064 = vadd.s32 %v1046, %v1051
          %v1065 = vadd.s32 %v1047, %v1051
          %v1066 = vadd.s32 %v1048, %v1051
          %v1067 = vadd.s32 %v1049, %v1051
          %vm1068 = vcmp.lt.s32.totalorder %v1052, 300
          %vm1069 = vcmp.lt.s32.totalorder %v1053, 300
          %vm1070 = vcmp.lt.s32.totalorder %v1054, 300
          %vm1071 = vcmp.lt.s32.totalorder %v1055, 300
          %vm1072 = vcmp.lt.s32.totalorder %v1056, 300
          %vm1073 = vcmp.lt.s32.totalorder %v1057, 300
          %vm1074 = vcmp.lt.s32.totalorder %v1058, 300
          %vm1075 = vcmp.lt.s32.totalorder %v1059, 300
          %vm1076 = vcmp.lt.s32.totalorder %v1060, 300
          %vm1077 = vcmp.lt.s32.totalorder %v1061, 300
          %vm1078 = vcmp.lt.s32.totalorder %v1062, 300
          %vm1079 = vcmp.lt.s32.totalorder %v1063, 300
          %vm1080 = vcmp.lt.s32.totalorder %v1064, 300
          %vm1081 = vcmp.lt.s32.totalorder %v1065, 300
          %vm1082 = vcmp.lt.s32.totalorder %v1066, 300
          %vm1083 = vcmp.lt.s32.totalorder %v1067, 300
          %v1084 = vsel %vm1068, 1, 0
          %v1085 = vsel %vm1069, 1, 0
          %v1086 = vsel %vm1070, 1, 0
          %v1087 = vsel %vm1071, 1, 0
          %v1088 = vsel %vm1072, 1, 0
          %v1089 = vsel %vm1073, 1, 0
          %v1090 = vsel %vm1074, 1, 0
          %v1091 = vsel %vm1075, 1, 0
          %v1092 = vsel %vm1076, 1, 0
          %v1093 = vsel %vm1077, 1, 0
          %v1094 = vsel %vm1078, 1, 0
          %v1095 = vsel %vm1079, 1, 0
          %v1096 = vsel %vm1080, 1, 0
          %v1097 = vsel %vm1081, 1, 0
          %v1098 = vsel %vm1082, 1, 0
          %v1099 = vsel %vm1083, 1, 0
          %v1100 = vcvt.s32.f32 %v1084
          %v1101 = vcvt.s32.f32 %v1085
          %v1102 = vcvt.s32.f32 %v1086
          %v1103 = vcvt.s32.f32 %v1087
          %v1104 = vcvt.s32.f32 %v1088
          %v1105 = vcvt.s32.f32 %v1089
          %v1106 = vcvt.s32.f32 %v1090
          %v1107 = vcvt.s32.f32 %v1091
          %v1108 = vcvt.s32.f32 %v1092
          %v1109 = vcvt.s32.f32 %v1093
          %v1110 = vcvt.s32.f32 %v1094
          %v1111 = vcvt.s32.f32 %v1095
          %v1112 = vcvt.s32.f32 %v1096
          %v1113 = vcvt.s32.f32 %v1097
          %v1114 = vcvt.s32.f32 %v1098
          %v1115 = vcvt.s32.f32 %v1099
          %v1116 = vld [vmem:[#allocation14] sm:$0x1]
          %v1118 = vlaneseq
          %v1119 = vshrl.u32 %v1118, 7
          %v1120 = vsub.s32 0, %v1119
          %v1121 = vrot.slane %v1116, %v1120
          %v1123 = vmul.f32 %v1121, %v1017
          %v1124 = vmul.f32 %v1121, %v1018
          %v1125 = vmul.f32 %v1121, %v1019
          %v1126 = vmul.f32 %v1121, %v1020
          %v1127 = vmul.f32 %v1121, %v1021
          %v1128 = vmul.f32 %v1121, %v1022
          %v1129 = vmul.f32 %v1121, %v1023
          %v1130 = vmul.f32 %v1121, %v1024
          %v1131 = vmul.f32 %v1121, %v1025
          %v1132 = vmul.f32 %v1121, %v1026
          %v1133 = vmul.f32 %v1121, %v1027
          %v1134 = vmul.f32 %v1121, %v1028
          %v1135 = vmul.f32 %v1121, %v1029
          %v1136 = vmul.f32 %v1121, %v1030
          %v1137 = vmul.f32 %v1121, %v1031
          %v1138 = vmul.f32 %v1121, %v1032
          %v1139 = vmul.f32 %v1123, %v1100
          %v1140 = vmul.f32 %v1124, %v1101
          %v1141 = vmul.f32 %v1125, %v1102
          %v1142 = vmul.f32 %v1126, %v1103
          %v1143 = vmul.f32 %v1127, %v1104
          %v1144 = vmul.f32 %v1128, %v1105
          %v1145 = vmul.f32 %v1129, %v1106
          %v1146 = vmul.f32 %v1130, %v1107
          %v1147 = vmul.f32 %v1131, %v1108
          %v1148 = vmul.f32 %v1132, %v1109
          %v1149 = vmul.f32 %v1133, %v1110
          %v1150 = vmul.f32 %v1134, %v1111
          %v1151 = vmul.f32 %v1135, %v1112
          %v1152 = vmul.f32 %v1136, %v1113
          %v1153 = vmul.f32 %v1137, %v1114
          %v1154 = vmul.f32 %v1138, %v1115
          %v1155 = vadd.f32 %v1139, %v1140
          %v1156 = vadd.f32 %v1155, %v1141
          %v1157 = vadd.f32 %v1156, %v1142
          %v1158 = vadd.f32 %v1157, %v1143
          %v1159 = vadd.f32 %v1158, %v1144
          %v1160 = vadd.f32 %v1159, %v1145
          %v1161 = vadd.f32 %v1160, %v1146
          %v1162 = vadd.f32 %v1161, %v1147
          %v1163 = vadd.f32 %v1162, %v1148
          %v1164 = vadd.f32 %v1163, %v1149
          %v1165 = vadd.f32 %v1164, %v1150
          %v1166 = vadd.f32 %v1165, %v1151
          %v1167 = vadd.f32 %v1166, %v1152
          %v1168 = vadd.f32 %v1167, %v1153
          %v1169 = vadd.f32 %v1168, %v1154
          %1170 = vadd.xlane.f32.xlu0 %v1169
          %v1171 = vpop.xlane.xlu0 %1170
          %v1172 = vrot.slane %v1171, 4
          %v1173 = vadd.f32 %v1171, %v1172
          %v1174 = vrot.slane %v1173, 2
          %v1175 = vadd.f32 %v1173, %v1174
          %v1176 = vrot.slane %v1175, 1
          %v1177 = vadd.f32 %v1175, %v1176
          %s1178 = vtos %v1177
          %v1179 = vstv %s1178
          %1180 = vst [vmem:[%s492] sm:$0xff] %v1179
        $region84: #{tpu_custom_call.1} parent=47 // pred_fallthru
          _
        %s1181 = sand.u32 %s232, 1
        %s1182 = scalar_lea.sflag [#allocation5], %s1181
        %s1183 = sand.u32 %s232, 1
        %s1184 = smul.addr %s1183, 128
        %s1185 = scalar_lea.vmem [#allocation16], %s1184
        %s1186 = sand.u32 %s260, 1
        %s1187 = scalar_lea.sflag [#allocation18], %s1186
        %s1188 = sand.u32 %s260, 1
        %s1189 = smul.addr %s1188, 8
        %s1190 = scalar_lea.vmem [#allocation17], %s1189
        // Predicated region
        $region85: #{tpu_custom_call.1} parent=47 // pred_check
          %p1191 = pneg %p242
        $region86: #{tpu_custom_call.1} parent=47 // pred_check_branch
          %1193 = sbr.rel (%p1191) target = $region88
        $region87: #{tpu_custom_call.1} parent=47 // pred_region
          %s1195 = ssub.s32 2048, 2048
          %1196 = vsyncadd %s1182, %s1195
          %s1197 = smul.addr %s40, 16
          %s1198 = smul.addr %s41, 48
          %s1199 = sadd.s32 %s1197, %s1198
          %s1200 = smul.addr %s1199, 128
          %s1201 = scalar_lea.hbm %s7, %s1200
          %s1202 = sshll.u32 %s1185, 4
          %s1203 = int_to_ptr.vmem [resolvable:$true] %s1202
          %1208 = dma.vmem_to_hbm [thread:$0]  %s1203, 2048, %s1201, %s1182, 128, 128, 8
        $region88: #{tpu_custom_call.1} parent=47 // pred_fallthru
          _
        // Predicated region
        $region89: #{tpu_custom_call.1} parent=47 // pred_check
          %p1209 = pneg %p270
        $region90: #{tpu_custom_call.1} parent=47 // pred_check_branch
          %1211 = sbr.rel (%p1209) target = $region92
        $region91: #{tpu_custom_call.1} parent=47 // pred_region
          %s1213 = ssub.s32 128, 128
          %1214 = vsyncadd %s1187, %s1213
          %s1215 = smul.addr %s40, 3
          %s1216 = sadd.s32 %s41, %s1215
          %s1217 = smul.addr %s1216, 128
          %s1218 = scalar_lea.hbm %s8, %s1217
          %s1220 = sshll.u32 %s1190, 4
          %s1221 = int_to_ptr.vmem [resolvable:$true] %s1220
          %1223 = dma.vmem_to_hbm [thread:$0]  %s1221, 128, %s1218, %s1187
        $region92: #{tpu_custom_call.1} parent=47 // pred_fallthru
          _
      $region48: #{tpu_custom_call.1} parent=5 // pred_fallthru
        _
      %p1224 = scmp.le.s32.totalorder 2, %s30
      // Predicated region
      $region93: #{tpu_custom_call.1} parent=5 // pred_check
        %p1225 = pneg %p1224
      $region94: #{tpu_custom_call.1} parent=5 // pred_check_branch
        %1227 = sbr.rel (%p1225) target = $region96
      $region95: #{tpu_custom_call.1} parent=5 // pred_region
        %s1228 = ssub.s32 %s30, 2
        // Predicated region
        $region97: #{tpu_custom_call.1} parent=95 // pred_check
          %p1229 = pneg %p248
        $region98: #{tpu_custom_call.1} parent=95 // pred_check_branch
          %1231 = sbr.rel (%p1229) target = $region100
        $region99: #{tpu_custom_call.1} parent=95 // pred_region
          %s1232 = sand.u32 %s233, 1
          %s1233 = scalar_lea.sflag [#allocation5], %s1232
          %s1234 = sand.u32 %s233, 1
          %s1235 = smul.addr %s1234, 128
          %s1236 = scalar_lea.vmem [#allocation16], %s1235
          %1237 = dma.done %s1233, 2048
        $region100: #{tpu_custom_call.1} parent=95 // pred_fallthru
          _
        // Predicated region
        $region101: #{tpu_custom_call.1} parent=95 // pred_check
          %p1238 = pneg %p276
        $region102: #{tpu_custom_call.1} parent=95 // pred_check_branch
          %1240 = sbr.rel (%p1238) target = $region104
        $region103: #{tpu_custom_call.1} parent=95 // pred_region
          %s1241 = sand.u32 %s261, 1
          %s1242 = scalar_lea.sflag [#allocation18], %s1241
          %s1243 = sand.u32 %s261, 1
          %s1244 = smul.addr %s1243, 8
          %s1245 = scalar_lea.vmem [#allocation17], %s1244
          %1246 = dma.done %s1242, 128
        $region104: #{tpu_custom_call.1} parent=95 // pred_fallthru
          _
      $region96: #{tpu_custom_call.1} parent=5 // pred_fallthru
        _
    $region6: #{tpu_custom_call.1} parent=1 // loop_footer
      %s34 = sadd.s32 1, %s30
    $region7: #{tpu_custom_call.1} parent=1 // loop_footer_branch
      %29 = sbr.rel target = $region3
    $region8: #{tpu_custom_call.1} parent=1 // loop_exit
      _
    %1247 = vsyncpa [#allocation4], 1
    %s1248 = scalar_lea.sflag [#allocation4], 1
    %1249 = vsyncpa %s1248, 1
    %1250 = vsyncpa [#allocation9], 1
    %s1251 = scalar_lea.sflag [#allocation9], 1
    %1252 = vsyncpa %s1251, 1
    %1253 = vsyncpa [#allocation12], 1
    %1254 = vsyncpa [#allocation15], 1
    %1255 = vsyncpa [#allocation5], 1
    %s1256 = scalar_lea.sflag [#allocation5], 1
    %1257 = vsyncpa %s1256, 1
    %1258 = vsyncpa [#allocation18], 1
    %s1259 = scalar_lea.sflag [#allocation18], 1
    %1260 = vsyncpa %s1259, 1
    %1261 = vsyncpa [#allocation6], 1
    %s1262 = scalar_lea.sflag [#allocation6], 1
    %1263 = vsyncpa %s1262, 1

</llo_original>
